<compile_context>
chip_gen: v5e
topology: v5e:2x2
jax: 0.10.0
libtpu: 0.0.40
codegen_flags: <defaults>
</compile_context>

<pallas_src>
import jax
import jax.numpy as jnp
from jax.experimental import pallas as pl
from jax.experimental.pallas import tpu as pltpu

EPS = 1e-5  # nn.LayerNorm default eps


def _layernorm(x, gamma, beta):
    # Fused single-sweep statistics: E[x] and E[x^2] -> mean / var.
    mu = jnp.mean(x, axis=-1, keepdims=True)
    ex2 = jnp.mean(x * x, axis=-1, keepdims=True)
    var = ex2 - mu * mu
    return (x - mu) * jax.lax.rsqrt(var + EPS) * gamma + beta


def fused_forward_kernel(
        x_hbm,
        wq_ref, wk_ref, wv_ref, bq_ref, bk_ref, bv_ref,
        wo_ref, bo_ref, g1_ref, b1_ref,
        w1_ref, bf1_ref, w2_ref, bf2_ref, g2_ref, b2_ref,
        wfc_hbm, bfc_hbm,
        out_ref,
        x_vmem, wfc_vmem, bfc_vmem, sem):
    b = pl.program_id(0)
    layer = pl.program_id(1)
    Bb, S, E = x_vmem.shape
    H = wq_ref.shape[-1]

    # First layer of this batch block: bring x (embed + pos, f32) into VMEM once.
    @pl.when(layer == 0)
    def _():
        if Bb == x_hbm.shape[0]:               # static (trace-time) choice
            src = x_hbm
        else:
            src = x_hbm.at[pl.ds(b * Bb, Bb)]
        cp = pltpu.make_async_copy(src, x_vmem, sem.at[0])
        cp.start()
        cp.wait()

    x = x_vmem[...].reshape(Bb * S, E)         # flatten (B,S) rows for the MXU
    xb = x.astype(jnp.bfloat16)

    # --- AttentionHead: separate lane-aligned q/k/v projections (bf16 x bf16 -> f32 acc) ---
    q = jnp.dot(xb, wq_ref[0], preferred_element_type=jnp.float32) + bq_ref[0]
    k = jnp.dot(xb, wk_ref[0], preferred_element_type=jnp.float32) + bk_ref[0]
    v = jnp.dot(xb, wv_ref[0], preferred_element_type=jnp.float32) + bv_ref[0]
    q = q * (1.0 / (H ** 0.5))                 # fold 1/sqrt(H) into q (SxH, not SxS)

    qb = q.reshape(Bb, S, H).astype(jnp.bfloat16)
    kb = k.reshape(Bb, S, H).astype(jnp.bfloat16)
    vb = v.reshape(Bb, S, H).astype(jnp.bfloat16)

    s = jnp.einsum('bqd,bkd->bqk', qb, kb, preferred_element_type=jnp.float32)
    s = s - jnp.max(s, axis=-1, keepdims=True)                 # stable softmax (f32)
    p = jnp.exp(s)
    p = p * pl.reciprocal(jnp.sum(p, axis=-1, keepdims=True), approx=True)
    attn = jnp.einsum('bqk,bkd->bqd', p.astype(jnp.bfloat16), vb,
                      preferred_element_type=jnp.float32)
    a = jnp.dot(attn.reshape(Bb * S, H).astype(jnp.bfloat16), wo_ref[0],
                preferred_element_type=jnp.float32) + bo_ref[0]

    # --- residual + norm1 (f32 elementwise) ---
    h = _layernorm(x + a, g1_ref[0], b1_ref[0])

    # --- FeedForward (bf16 operands, f32 accumulation) ---
    ff = jnp.dot(h.astype(jnp.bfloat16), w1_ref[0],
                 preferred_element_type=jnp.float32) + bf1_ref[0]
    ff = jnp.maximum(ff, 0.0)
    ff = jnp.dot(ff.astype(jnp.bfloat16), w2_ref[0],
                 preferred_element_type=jnp.float32) + bf2_ref[0]

    # --- residual + norm2; activation stays resident in VMEM across layers ---
    y = _layernorm(h + ff, g2_ref[0], b2_ref[0])
    x_vmem[...] = y.reshape(Bb, S, E)

    # Last layer: DMA the (once-used) classifier weights, mean-pool + project.
    @pl.when(layer == pl.num_programs(1) - 1)
    def _():
        cw = pltpu.make_async_copy(wfc_hbm, wfc_vmem, sem.at[0])
        cb = pltpu.make_async_copy(bfc_hbm, bfc_vmem, sem.at[1])
        cw.start()
        cb.start()
        cw.wait()
        cb.wait()
        pooled = jnp.mean(x_vmem[...], axis=1)                 # (Bb, E)
        out_ref[...] = (jnp.dot(pooled, wfc_vmem[...],
                                preferred_element_type=jnp.float32)
                        + bfc_vmem[...])


_STACKED_KEYS = ("wq", "wk", "wv", "bq", "bk", "bv", "wo", "bo",
                 "g1", "b1", "w1", "bf1", "w2", "bf2", "g2", "b2")


def _per_layer(b, l):
    return (l, 0, 0)


def _out_map(b, l):
    return (b, 0)


def transformer_classifier(token_ids, params, *, b_blk=None):
    B, S = token_ids.shape
    E = params["embed"].shape[1]
    C = params["wfc"].shape[1]
    L = params["wq"].shape[0]
    assert S <= params["pos"].shape[1], "positional table shorter than sequence"

    # v7x: choose b_blk < B (e.g. B//2, multiple of 8 rows) to give megacore a
    # 'parallel' axis to shard.  At tiny B we keep a single block.
    if b_blk is None or b_blk <= 0 or b_blk > B or B % b_blk != 0:
        b_blk = B
    nb = B // b_blk

    # Embedding gather (data-dependent row gather) + positional add stay in plain JAX.
    x = (jnp.take(params["embed"], token_ids, axis=0)
         + params["pos"][:, :S]).astype(jnp.float32)

    stacked = [params[k] for k in _STACKED_KEYS]

    in_specs = [pl.BlockSpec(memory_space=pl.ANY)]           # x: DMA'd once at layer 0
    for w in stacked:                                        # per-layer weights streamed
        in_specs.append(pl.BlockSpec((1,) + w.shape[1:], _per_layer))
    in_specs += [pl.BlockSpec(memory_space=pl.ANY),          # wfc: DMA'd at last layer
                 pl.BlockSpec(memory_space=pl.ANY)]          # bfc

    return pl.pallas_call(
        fused_forward_kernel,
        out_shape=jax.ShapeDtypeStruct((B, C), jnp.float32),
        grid=(nb, L),
        in_specs=in_specs,
        out_specs=pl.BlockSpec((b_blk, C), _out_map),
        scratch_shapes=[
            pltpu.VMEM((b_blk, S, E), jnp.float32),   # resident activation across layers
            pltpu.VMEM((E, C), jnp.float32),          # classifier weight (used once)
            pltpu.VMEM((1, C), jnp.float32),          # classifier bias
            pltpu.SemaphoreType.DMA((2,)),
        ],
        compiler_params=pltpu.CompilerParams(
            dimension_semantics=("parallel", "arbitrary"),
            vmem_limit_bytes=32 * 1024 * 1024),
    )(x, *stacked, params["wfc"], params["bfc"])


# ---------------- parameter construction (deterministic) ----------------

def init_params(key, vocab_size, emb_size, num_heads, num_layers, num_classes,
                max_seq=128):
    head = emb_size // num_heads
    hidden = 4 * emb_size
    ks = jax.random.split(key, 20)
    bf = jnp.bfloat16

    def rnd(kk, shape, scale=0.02, dtype=jnp.float32):
        return (scale * jax.random.normal(kk, shape, jnp.float32)).astype(dtype)

    return {
        "embed": rnd(ks[0], (vocab_size, emb_size)),
        "pos":   rnd(ks[1], (1, max_seq, emb_size)),
        "wfc":   rnd(ks[2], (emb_size, num_classes)),
        "bfc":   rnd(ks[3], (1, num_classes)),
        # stacked per-layer parameters (layout: in_features x out_features);
        # large matmul weights stored bf16 (streamed from HBM), small params f32.
        "wq":  rnd(ks[4], (num_layers, emb_size, head), dtype=bf),
        "wk":  rnd(ks[5], (num_layers, emb_size, head), dtype=bf),
        "wv":  rnd(ks[6], (num_layers, emb_size, head), dtype=bf),
        "bq":  rnd(ks[7], (num_layers, 1, head)),
        "bk":  rnd(ks[8], (num_layers, 1, head)),
        "bv":  rnd(ks[9], (num_layers, 1, head)),
        "wo":  rnd(ks[10], (num_layers, head, emb_size), dtype=bf),
        "bo":  rnd(ks[11], (num_layers, 1, emb_size)),
        "g1":  1.0 + rnd(ks[12], (num_layers, 1, emb_size), scale=0.1),
        "b1":  rnd(ks[13], (num_layers, 1, emb_size), scale=0.05),
        "w1":  rnd(ks[14], (num_layers, emb_size, hidden), dtype=bf),
        "bf1": rnd(ks[15], (num_layers, 1, hidden)),
        "w2":  rnd(ks[16], (num_layers, hidden, emb_size), dtype=bf),
        "bf2": rnd(ks[17], (num_layers, 1, emb_size)),
        "g2":  1.0 + rnd(ks[18], (num_layers, 1, emb_size), scale=0.1),
        "b2":  rnd(ks[19], (num_layers, 1, emb_size), scale=0.05),
    }


# ---------------- pure-JAX reference for verification ----------------

def _ln_ref(x, gamma, beta):
    mu = x.mean(-1, keepdims=True)
    var = ((x - mu) ** 2).mean(-1, keepdims=True)
    return (x - mu) / jnp.sqrt(var + EPS) * gamma + beta


def _ref_forward(token_ids, params):
    S = token_ids.shape[1]
    f32 = lambda a: a.astype(jnp.float32)
    x = jnp.take(params["embed"], token_ids, axis=0) + params["pos"][:, :S]
    L = params["wq"].shape[0]
    for l in range(L):
        q = x @ f32(params["wq"][l]) + params["bq"][l]
        k = x @ f32(params["wk"][l]) + params["bk"][l]
        v = x @ f32(params["wv"][l]) + params["bv"][l]
        w = jax.nn.softmax(q @ jnp.swapaxes(k, -2, -1) / (k.shape[-1] ** 0.5), axis=-1)
        a = (w @ v) @ f32(params["wo"][l]) + params["bo"][l]
        h = _ln_ref(x + a, params["g1"][l], params["b1"][l])
        ff = jnp.maximum(h @ f32(params["w1"][l]) + params["bf1"][l], 0.0)
        ff = ff @ f32(params["w2"][l]) + params["bf2"][l]
        x = _ln_ref(h + ff, params["g2"][l], params["b2"][l])
    return x.mean(axis=1) @ params["wfc"] + params["bfc"]


if __name__ == "__main__":
    # Small but 128-aligned on the contraction dims (E=128, hidden=512, head=32).
    vocab_size, emb_size, num_heads, num_layers, num_classes = 64, 128, 4, 2, 2
    B, S = 2, 16

    key = jax.random.PRNGKey(0)
    pkey, xkey = jax.random.split(key)
    params = init_params(pkey, vocab_size, emb_size, num_heads, num_layers, num_classes)
    token_ids = jax.random.randint(xkey, (B, S), 0, vocab_size, dtype=jnp.int32)

    out = transformer_classifier(token_ids, params)
    out = jax.block_until_ready(out)

    ref = _ref_forward(token_ids, params)
    assert out.shape == (B, num_classes)
    # Tolerance covers the bf16 matmul-operand casts and the EUP approximate
    # reciprocal in the softmax denominator (reference is full f32).
    assert jnp.allclose(out, ref, atol=2e-2, rtol=2e-2), (out, ref)

    print("KERNEL_OK")
</pallas_src>

<mosaic_0001>
module attributes {stable_mosaic.version = 11 : i64} {
  func.func @fused_forward_kernel(%arg0: i32, %arg1: i32, %arg2: memref<2x16x128xf32, #tpu.memory_space<any>>, %arg3: memref<1x128x32xbf16, #tpu.memory_space<vmem>>, %arg4: memref<1x128x32xbf16, #tpu.memory_space<vmem>>, %arg5: memref<1x128x32xbf16, #tpu.memory_space<vmem>>, %arg6: memref<1x1x32xf32, #tpu.memory_space<vmem>>, %arg7: memref<1x1x32xf32, #tpu.memory_space<vmem>>, %arg8: memref<1x1x32xf32, #tpu.memory_space<vmem>>, %arg9: memref<1x32x128xbf16, #tpu.memory_space<vmem>>, %arg10: memref<1x1x128xf32, #tpu.memory_space<vmem>>, %arg11: memref<1x1x128xf32, #tpu.memory_space<vmem>>, %arg12: memref<1x1x128xf32, #tpu.memory_space<vmem>>, %arg13: memref<1x128x512xbf16, #tpu.memory_space<vmem>>, %arg14: memref<1x1x512xf32, #tpu.memory_space<vmem>>, %arg15: memref<1x512x128xbf16, #tpu.memory_space<vmem>>, %arg16: memref<1x1x128xf32, #tpu.memory_space<vmem>>, %arg17: memref<1x1x128xf32, #tpu.memory_space<vmem>>, %arg18: memref<1x1x128xf32, #tpu.memory_space<vmem>>, %arg19: memref<128x2xf32, #tpu.memory_space<any>>, %arg20: memref<1x2xf32, #tpu.memory_space<any>>, %arg21: memref<2x2xf32, #tpu.memory_space<vmem>>, %arg22: memref<2x16x128xf32, #tpu.memory_space<vmem>>, %arg23: memref<128x2xf32, #tpu.memory_space<vmem>>, %arg24: memref<1x2xf32, #tpu.memory_space<vmem>>, %arg25: memref<2x!tpu.dma_semaphore, #tpu.memory_space<semaphore_mem>>) attributes {dimension_semantics = [#tpu.dimension_semantics<parallel>, #tpu.dimension_semantics<arbitrary>], iteration_bounds = array<i64: 1, 2>, scalar_prefetch = 0 : i64, scratch_operands = 4 : i64, tpu.core_type = #tpu.core_type<tc>, window_params = [{}, {transform_indices = @transform_1, window_bounds = array<i64: 1, 128, 32>}, {transform_indices = @transform_2, window_bounds = array<i64: 1, 128, 32>}, {transform_indices = @transform_3, window_bounds = array<i64: 1, 128, 32>}, {transform_indices = @transform_4, window_bounds = array<i64: 1, 1, 32>}, {transform_indices = @transform_5, window_bounds = array<i64: 1, 1, 32>}, {transform_indices = @transform_6, window_bounds = array<i64: 1, 1, 32>}, {transform_indices = @transform_7, window_bounds = array<i64: 1, 32, 128>}, {transform_indices = @transform_8, window_bounds = array<i64: 1, 1, 128>}, {transform_indices = @transform_9, window_bounds = array<i64: 1, 1, 128>}, {transform_indices = @transform_10, window_bounds = array<i64: 1, 1, 128>}, {transform_indices = @transform_11, window_bounds = array<i64: 1, 128, 512>}, {transform_indices = @transform_12, window_bounds = array<i64: 1, 1, 512>}, {transform_indices = @transform_13, window_bounds = array<i64: 1, 512, 128>}, {transform_indices = @transform_14, window_bounds = array<i64: 1, 1, 128>}, {transform_indices = @transform_15, window_bounds = array<i64: 1, 1, 128>}, {transform_indices = @transform_16, window_bounds = array<i64: 1, 1, 128>}, {}, {}, {transform_indices = @transform_19, window_bounds = array<i64: 2, 2>}]} {
    %c0_i32 = arith.constant 0 : i32
    %0 = arith.cmpi eq, %arg1, %c0_i32 : i32
    %1 = arith.extui %0 : i1 to i32
    %c0_i32_0 = arith.constant 0 : i32
    %2 = arith.cmpi ne, %1, %c0_i32_0 : i32
    scf.if %2 {
      %c0_i32_76 = arith.constant 0 : i32
      %134 = tpu.memref_slice %arg25[%c0_i32_76] : memref<2x!tpu.dma_semaphore, #tpu.memory_space<semaphore_mem>> -> memref<1x!tpu.dma_semaphore, #tpu.memory_space<semaphore_mem>>
      %135 = tpu.memref_squeeze %134 : memref<1x!tpu.dma_semaphore, #tpu.memory_space<semaphore_mem>> -> memref<!tpu.dma_semaphore, #tpu.memory_space<semaphore_mem>>
      tpu.enqueue_dma source(%arg2 : memref<2x16x128xf32, #tpu.memory_space<any>>) target(%arg22 : memref<2x16x128xf32, #tpu.memory_space<vmem>>) target_semaphore(%135 : memref<!tpu.dma_semaphore, #tpu.memory_space<semaphore_mem>>)
      %c0_i32_77 = arith.constant 0 : i32
      %136 = tpu.memref_slice %arg25[%c0_i32_77] : memref<2x!tpu.dma_semaphore, #tpu.memory_space<semaphore_mem>> -> memref<1x!tpu.dma_semaphore, #tpu.memory_space<semaphore_mem>>
      %137 = tpu.memref_squeeze %136 : memref<1x!tpu.dma_semaphore, #tpu.memory_space<semaphore_mem>> -> memref<!tpu.dma_semaphore, #tpu.memory_space<semaphore_mem>>
      tpu.wait_dma2 semaphore(%137 : memref<!tpu.dma_semaphore, #tpu.memory_space<semaphore_mem>>) src(%arg2 : memref<2x16x128xf32, #tpu.memory_space<any>>) dst(%arg22 : memref<2x16x128xf32, #tpu.memory_space<vmem>>)
    } else {
    }
    %c0 = arith.constant 0 : index
    %c0_1 = arith.constant 0 : index
    %c0_2 = arith.constant 0 : index
    %3 = vector.load %arg22[%c0, %c0_1, %c0_2] : memref<2x16x128xf32, #tpu.memory_space<vmem>>, vector<2x16x128xf32>
    %4 = vector.shape_cast %3 : vector<2x16x128xf32> to vector<32x128xf32>
    %5 = arith.truncf %4 : vector<32x128xf32> to vector<32x128xbf16>
    %c0_3 = arith.constant 0 : index
    %c0_4 = arith.constant 0 : index
    %c0_5 = arith.constant 0 : index
    %6 = vector.load %arg3[%c0_3, %c0_4, %c0_5] : memref<1x128x32xbf16, #tpu.memory_space<vmem>>, vector<1x128x32xbf16>
    %7 = vector.shape_cast %6 : vector<1x128x32xbf16> to vector<128x32xbf16>
    %cst = arith.constant dense<0.000000e+00> : vector<32x32xf32>
    %8 = tpu.matmul %5, %7, %cst {dimension_numbers = #tpu.dot_dimension_numbers<[1], [0], [0], [1], [0, 0, 1, 1], [], []>} : vector<32x128xbf16>, vector<128x32xbf16>, vector<32x32xf32> -> vector<32x32xf32>
    %c0_6 = arith.constant 0 : index
    %c0_7 = arith.constant 0 : index
    %c0_8 = arith.constant 0 : index
    %9 = vector.load %arg6[%c0_6, %c0_7, %c0_8] : memref<1x1x32xf32, #tpu.memory_space<vmem>>, vector<1x1x32xf32>
    %10 = vector.shape_cast %9 : vector<1x1x32xf32> to vector<1x32xf32>
    %11 = vector.broadcast %10 : vector<1x32xf32> to vector<32x32xf32>
    %12 = arith.addf %8, %11 : vector<32x32xf32>
    %c0_9 = arith.constant 0 : index
    %c0_10 = arith.constant 0 : index
    %c0_11 = arith.constant 0 : index
    %13 = vector.load %arg4[%c0_9, %c0_10, %c0_11] : memref<1x128x32xbf16, #tpu.memory_space<vmem>>, vector<1x128x32xbf16>
    %14 = vector.shape_cast %13 : vector<1x128x32xbf16> to vector<128x32xbf16>
    %cst_12 = arith.constant dense<0.000000e+00> : vector<32x32xf32>
    %15 = tpu.matmul %5, %14, %cst_12 {dimension_numbers = #tpu.dot_dimension_numbers<[1], [0], [0], [1], [0, 0, 1, 1], [], []>} : vector<32x128xbf16>, vector<128x32xbf16>, vector<32x32xf32> -> vector<32x32xf32>
    %c0_13 = arith.constant 0 : index
    %c0_14 = arith.constant 0 : index
    %c0_15 = arith.constant 0 : index
    %16 = vector.load %arg7[%c0_13, %c0_14, %c0_15] : memref<1x1x32xf32, #tpu.memory_space<vmem>>, vector<1x1x32xf32>
    %17 = vector.shape_cast %16 : vector<1x1x32xf32> to vector<1x32xf32>
    %18 = vector.broadcast %17 : vector<1x32xf32> to vector<32x32xf32>
    %19 = arith.addf %15, %18 : vector<32x32xf32>
    %c0_16 = arith.constant 0 : index
    %c0_17 = arith.constant 0 : index
    %c0_18 = arith.constant 0 : index
    %20 = vector.load %arg5[%c0_16, %c0_17, %c0_18] : memref<1x128x32xbf16, #tpu.memory_space<vmem>>, vector<1x128x32xbf16>
    %21 = vector.shape_cast %20 : vector<1x128x32xbf16> to vector<128x32xbf16>
    %cst_19 = arith.constant dense<0.000000e+00> : vector<32x32xf32>
    %22 = tpu.matmul %5, %21, %cst_19 {dimension_numbers = #tpu.dot_dimension_numbers<[1], [0], [0], [1], [0, 0, 1, 1], [], []>} : vector<32x128xbf16>, vector<128x32xbf16>, vector<32x32xf32> -> vector<32x32xf32>
    %c0_20 = arith.constant 0 : index
    %c0_21 = arith.constant 0 : index
    %c0_22 = arith.constant 0 : index
    %23 = vector.load %arg8[%c0_20, %c0_21, %c0_22] : memref<1x1x32xf32, #tpu.memory_space<vmem>>, vector<1x1x32xf32>
    %24 = vector.shape_cast %23 : vector<1x1x32xf32> to vector<1x32xf32>
    %25 = vector.broadcast %24 : vector<1x32xf32> to vector<32x32xf32>
    %26 = arith.addf %22, %25 : vector<32x32xf32>
    %cst_23 = arith.constant 0.176776692 : f32
    %27 = vector.broadcast %cst_23 : f32 to vector<32x32xf32>
    %28 = arith.mulf %12, %27 : vector<32x32xf32>
    %29 = vector.shape_cast %28 : vector<32x32xf32> to vector<2x16x32xf32>
    %30 = arith.truncf %29 : vector<2x16x32xf32> to vector<2x16x32xbf16>
    %31 = vector.shape_cast %19 : vector<32x32xf32> to vector<2x16x32xf32>
    %32 = arith.truncf %31 : vector<2x16x32xf32> to vector<2x16x32xbf16>
    %33 = vector.shape_cast %26 : vector<32x32xf32> to vector<2x16x32xf32>
    %34 = arith.truncf %33 : vector<2x16x32xf32> to vector<2x16x32xbf16>
    "tpu.trace_start"() <{level = 10 : i32, message = "bqd,bkd->bqk"}> : () -> ()
    %cst_24 = arith.constant dense<0.000000e+00> : vector<2x16x16xf32>
    %35 = tpu.matmul %30, %32, %cst_24 {dimension_numbers = #tpu.dot_dimension_numbers<[2], [2], [1], [1], [0, 0, 0, 1, 1, 1], [0], [0]>} : vector<2x16x32xbf16>, vector<2x16x32xbf16>, vector<2x16x16xf32> -> vector<2x16x16xf32>
    "tpu.trace_stop"() : () -> ()
    %cst_25 = arith.constant dense<0xFF800000> : vector<2x16xf32>
    %36 = vector.multi_reduction <maximumf>, %35, %cst_25 [2] : vector<2x16x16xf32> to vector<2x16xf32>
    %37 = vector.shape_cast %36 : vector<2x16xf32> to vector<2x16x1xf32>
    %38 = vector.broadcast %37 : vector<2x16x1xf32> to vector<2x16x16xf32>
    %39 = arith.subf %35, %38 : vector<2x16x16xf32>
    %40 = math.exp %39 : vector<2x16x16xf32>
    %cst_26 = arith.constant dense<0.000000e+00> : vector<2x16xf32>
    %41 = vector.multi_reduction <add>, %40, %cst_26 [2] : vector<2x16x16xf32> to vector<2x16xf32>
    %42 = vector.shape_cast %41 : vector<2x16xf32> to vector<2x16x1xf32>
    %43 = tpu.reciprocal %42 {approx = true} : vector<2x16x1xf32> -> vector<2x16x1xf32>
    %44 = vector.broadcast %43 : vector<2x16x1xf32> to vector<2x16x16xf32>
    %45 = arith.mulf %40, %44 : vector<2x16x16xf32>
    %46 = arith.truncf %45 : vector<2x16x16xf32> to vector<2x16x16xbf16>
    "tpu.trace_start"() <{level = 10 : i32, message = "bqk,bkd->bqd"}> : () -> ()
    %cst_27 = arith.constant dense<0.000000e+00> : vector<2x16x32xf32>
    %47 = tpu.matmul %46, %34, %cst_27 {dimension_numbers = #tpu.dot_dimension_numbers<[2], [1], [1], [2], [0, 0, 0, 1, 1, 2], [0], [0]>} : vector<2x16x16xbf16>, vector<2x16x32xbf16>, vector<2x16x32xf32> -> vector<2x16x32xf32>
    "tpu.trace_stop"() : () -> ()
    %48 = vector.shape_cast %47 : vector<2x16x32xf32> to vector<32x32xf32>
    %49 = arith.truncf %48 : vector<32x32xf32> to vector<32x32xbf16>
    %c0_28 = arith.constant 0 : index
    %c0_29 = arith.constant 0 : index
    %c0_30 = arith.constant 0 : index
    %50 = vector.load %arg9[%c0_28, %c0_29, %c0_30] : memref<1x32x128xbf16, #tpu.memory_space<vmem>>, vector<1x32x128xbf16>
    %51 = vector.shape_cast %50 : vector<1x32x128xbf16> to vector<32x128xbf16>
    %cst_31 = arith.constant dense<0.000000e+00> : vector<32x128xf32>
    %52 = tpu.matmul %49, %51, %cst_31 {dimension_numbers = #tpu.dot_dimension_numbers<[1], [0], [0], [1], [0, 0, 1, 1], [], []>} : vector<32x32xbf16>, vector<32x128xbf16>, vector<32x128xf32> -> vector<32x128xf32>
    %c0_32 = arith.constant 0 : index
    %c0_33 = arith.constant 0 : index
    %c0_34 = arith.constant 0 : index
    %53 = vector.load %arg10[%c0_32, %c0_33, %c0_34] : memref<1x1x128xf32, #tpu.memory_space<vmem>>, vector<1x1x128xf32>
    %54 = vector.shape_cast %53 : vector<1x1x128xf32> to vector<1x128xf32>
    %55 = vector.broadcast %54 : vector<1x128xf32> to vector<32x128xf32>
    %56 = arith.addf %52, %55 : vector<32x128xf32>
    %57 = arith.addf %4, %56 : vector<32x128xf32>
    %c0_35 = arith.constant 0 : index
    %c0_36 = arith.constant 0 : index
    %c0_37 = arith.constant 0 : index
    %58 = vector.load %arg11[%c0_35, %c0_36, %c0_37] : memref<1x1x128xf32, #tpu.memory_space<vmem>>, vector<1x1x128xf32>
    %59 = vector.shape_cast %58 : vector<1x1x128xf32> to vector<1x128xf32>
    %c0_38 = arith.constant 0 : index
    %c0_39 = arith.constant 0 : index
    %c0_40 = arith.constant 0 : index
    %60 = vector.load %arg12[%c0_38, %c0_39, %c0_40] : memref<1x1x128xf32, #tpu.memory_space<vmem>>, vector<1x1x128xf32>
    %61 = vector.shape_cast %60 : vector<1x1x128xf32> to vector<1x128xf32>
    %cst_41 = arith.constant dense<0.000000e+00> : vector<32xf32>
    %62 = vector.multi_reduction <add>, %57, %cst_41 [1] : vector<32x128xf32> to vector<32xf32>
    %63 = vector.shape_cast %62 : vector<32xf32> to vector<32x1xf32>
    %cst_42 = arith.constant 1.280000e+02 : f32
    %64 = vector.broadcast %cst_42 : f32 to vector<32x1xf32>
    %65 = arith.divf %63, %64 : vector<32x1xf32>
    %66 = arith.mulf %57, %57 : vector<32x128xf32>
    %cst_43 = arith.constant dense<0.000000e+00> : vector<32xf32>
    %67 = vector.multi_reduction <add>, %66, %cst_43 [1] : vector<32x128xf32> to vector<32xf32>
    %68 = vector.shape_cast %67 : vector<32xf32> to vector<32x1xf32>
    %cst_44 = arith.constant 1.280000e+02 : f32
    %69 = vector.broadcast %cst_44 : f32 to vector<32x1xf32>
    %70 = arith.divf %68, %69 : vector<32x1xf32>
    %71 = arith.mulf %65, %65 : vector<32x1xf32>
    %72 = arith.subf %70, %71 : vector<32x1xf32>
    %73 = vector.broadcast %65 : vector<32x1xf32> to vector<32x128xf32>
    %74 = arith.subf %57, %73 : vector<32x128xf32>
    %cst_45 = arith.constant 9.99999974E-6 : f32
    %75 = vector.broadcast %cst_45 : f32 to vector<32x1xf32>
    %76 = arith.addf %72, %75 : vector<32x1xf32>
    %77 = math.rsqrt %76 : vector<32x1xf32>
    %78 = vector.broadcast %77 : vector<32x1xf32> to vector<32x128xf32>
    %79 = arith.mulf %74, %78 : vector<32x128xf32>
    %80 = vector.broadcast %59 : vector<1x128xf32> to vector<32x128xf32>
    %81 = arith.mulf %79, %80 : vector<32x128xf32>
    %82 = vector.broadcast %61 : vector<1x128xf32> to vector<32x128xf32>
    %83 = arith.addf %81, %82 : vector<32x128xf32>
    %84 = arith.truncf %83 : vector<32x128xf32> to vector<32x128xbf16>
    %c0_46 = arith.constant 0 : index
    %c0_47 = arith.constant 0 : index
    %c0_48 = arith.constant 0 : index
    %85 = vector.load %arg13[%c0_46, %c0_47, %c0_48] : memref<1x128x512xbf16, #tpu.memory_space<vmem>>, vector<1x128x512xbf16>
    %86 = vector.shape_cast %85 : vector<1x128x512xbf16> to vector<128x512xbf16>
    %cst_49 = arith.constant dense<0.000000e+00> : vector<32x512xf32>
    %87 = tpu.matmul %84, %86, %cst_49 {dimension_numbers = #tpu.dot_dimension_numbers<[1], [0], [0], [1], [0, 0, 1, 1], [], []>} : vector<32x128xbf16>, vector<128x512xbf16>, vector<32x512xf32> -> vector<32x512xf32>
    %c0_50 = arith.constant 0 : index
    %c0_51 = arith.constant 0 : index
    %c0_52 = arith.constant 0 : index
    %88 = vector.load %arg14[%c0_50, %c0_51, %c0_52] : memref<1x1x512xf32, #tpu.memory_space<vmem>>, vector<1x1x512xf32>
    %89 = vector.shape_cast %88 : vector<1x1x512xf32> to vector<1x512xf32>
    %90 = vector.broadcast %89 : vector<1x512xf32> to vector<32x512xf32>
    %91 = arith.addf %87, %90 : vector<32x512xf32>
    %cst_53 = arith.constant 0.000000e+00 : f32
    %92 = vector.broadcast %cst_53 : f32 to vector<32x512xf32>
    %93 = arith.maximumf %91, %92 : vector<32x512xf32>
    %94 = arith.truncf %93 : vector<32x512xf32> to vector<32x512xbf16>
    %c0_54 = arith.constant 0 : index
    %c0_55 = arith.constant 0 : index
    %c0_56 = arith.constant 0 : index
    %95 = vector.load %arg15[%c0_54, %c0_55, %c0_56] : memref<1x512x128xbf16, #tpu.memory_space<vmem>>, vector<1x512x128xbf16>
    %96 = vector.shape_cast %95 : vector<1x512x128xbf16> to vector<512x128xbf16>
    %cst_57 = arith.constant dense<0.000000e+00> : vector<32x128xf32>
    %97 = tpu.matmul %94, %96, %cst_57 {dimension_numbers = #tpu.dot_dimension_numbers<[1], [0], [0], [1], [0, 0, 1, 1], [], []>} : vector<32x512xbf16>, vector<512x128xbf16>, vector<32x128xf32> -> vector<32x128xf32>
    %c0_58 = arith.constant 0 : index
    %c0_59 = arith.constant 0 : index
    %c0_60 = arith.constant 0 : index
    %98 = vector.load %arg16[%c0_58, %c0_59, %c0_60] : memref<1x1x128xf32, #tpu.memory_space<vmem>>, vector<1x1x128xf32>
    %99 = vector.shape_cast %98 : vector<1x1x128xf32> to vector<1x128xf32>
    %100 = vector.broadcast %99 : vector<1x128xf32> to vector<32x128xf32>
    %101 = arith.addf %97, %100 : vector<32x128xf32>
    %102 = arith.addf %83, %101 : vector<32x128xf32>
    %c0_61 = arith.constant 0 : index
    %c0_62 = arith.constant 0 : index
    %c0_63 = arith.constant 0 : index
    %103 = vector.load %arg17[%c0_61, %c0_62, %c0_63] : memref<1x1x128xf32, #tpu.memory_space<vmem>>, vector<1x1x128xf32>
    %104 = vector.shape_cast %103 : vector<1x1x128xf32> to vector<1x128xf32>
    %c0_64 = arith.constant 0 : index
    %c0_65 = arith.constant 0 : index
    %c0_66 = arith.constant 0 : index
    %105 = vector.load %arg18[%c0_64, %c0_65, %c0_66] : memref<1x1x128xf32, #tpu.memory_space<vmem>>, vector<1x1x128xf32>
    %106 = vector.shape_cast %105 : vector<1x1x128xf32> to vector<1x128xf32>
    %cst_67 = arith.constant dense<0.000000e+00> : vector<32xf32>
    %107 = vector.multi_reduction <add>, %102, %cst_67 [1] : vector<32x128xf32> to vector<32xf32>
    %108 = vector.shape_cast %107 : vector<32xf32> to vector<32x1xf32>
    %cst_68 = arith.constant 1.280000e+02 : f32
    %109 = vector.broadcast %cst_68 : f32 to vector<32x1xf32>
    %110 = arith.divf %108, %109 : vector<32x1xf32>
    %111 = arith.mulf %102, %102 : vector<32x128xf32>
    %cst_69 = arith.constant dense<0.000000e+00> : vector<32xf32>
    %112 = vector.multi_reduction <add>, %111, %cst_69 [1] : vector<32x128xf32> to vector<32xf32>
    %113 = vector.shape_cast %112 : vector<32xf32> to vector<32x1xf32>
    %cst_70 = arith.constant 1.280000e+02 : f32
    %114 = vector.broadcast %cst_70 : f32 to vector<32x1xf32>
    %115 = arith.divf %113, %114 : vector<32x1xf32>
    %116 = arith.mulf %110, %110 : vector<32x1xf32>
    %117 = arith.subf %115, %116 : vector<32x1xf32>
    %118 = vector.broadcast %110 : vector<32x1xf32> to vector<32x128xf32>
    %119 = arith.subf %102, %118 : vector<32x128xf32>
    %cst_71 = arith.constant 9.99999974E-6 : f32
    %120 = vector.broadcast %cst_71 : f32 to vector<32x1xf32>
    %121 = arith.addf %117, %120 : vector<32x1xf32>
    %122 = math.rsqrt %121 : vector<32x1xf32>
    %123 = vector.broadcast %122 : vector<32x1xf32> to vector<32x128xf32>
    %124 = arith.mulf %119, %123 : vector<32x128xf32>
    %125 = vector.broadcast %104 : vector<1x128xf32> to vector<32x128xf32>
    %126 = arith.mulf %124, %125 : vector<32x128xf32>
    %127 = vector.broadcast %106 : vector<1x128xf32> to vector<32x128xf32>
    %128 = arith.addf %126, %127 : vector<32x128xf32>
    %129 = vector.shape_cast %128 : vector<32x128xf32> to vector<2x16x128xf32>
    %c0_72 = arith.constant 0 : index
    %c0_73 = arith.constant 0 : index
    %c0_74 = arith.constant 0 : index
    %130 = vector.load %arg22[%c0_72, %c0_73, %c0_74] : memref<2x16x128xf32, #tpu.memory_space<vmem>>, vector<2x16x128xf32>
    tpu.vector_store %arg22[%c0_72, %c0_73, %c0_74], %129 {strides = array<i32>} : memref<2x16x128xf32, #tpu.memory_space<vmem>>, vector<2x16x128xf32>,
    %c1_i32 = arith.constant 1 : i32
    %131 = arith.cmpi eq, %arg1, %c1_i32 : i32
    %132 = arith.extui %131 : i1 to i32
    %c0_i32_75 = arith.constant 0 : i32
    %133 = arith.cmpi ne, %132, %c0_i32_75 : i32
    scf.if %133 {
      %c0_i32_76 = arith.constant 0 : i32
      %134 = tpu.memref_slice %arg25[%c0_i32_76] : memref<2x!tpu.dma_semaphore, #tpu.memory_space<semaphore_mem>> -> memref<1x!tpu.dma_semaphore, #tpu.memory_space<semaphore_mem>>
      %135 = tpu.memref_squeeze %134 : memref<1x!tpu.dma_semaphore, #tpu.memory_space<semaphore_mem>> -> memref<!tpu.dma_semaphore, #tpu.memory_space<semaphore_mem>>
      tpu.enqueue_dma source(%arg19 : memref<128x2xf32, #tpu.memory_space<any>>) target(%arg23 : memref<128x2xf32, #tpu.memory_space<vmem>>) target_semaphore(%135 : memref<!tpu.dma_semaphore, #tpu.memory_space<semaphore_mem>>)
      %c1_i32_77 = arith.constant 1 : i32
      %136 = tpu.memref_slice %arg25[%c1_i32_77] : memref<2x!tpu.dma_semaphore, #tpu.memory_space<semaphore_mem>> -> memref<1x!tpu.dma_semaphore, #tpu.memory_space<semaphore_mem>>
      %137 = tpu.memref_squeeze %136 : memref<1x!tpu.dma_semaphore, #tpu.memory_space<semaphore_mem>> -> memref<!tpu.dma_semaphore, #tpu.memory_space<semaphore_mem>>
      tpu.enqueue_dma source(%arg20 : memref<1x2xf32, #tpu.memory_space<any>>) target(%arg24 : memref<1x2xf32, #tpu.memory_space<vmem>>) target_semaphore(%137 : memref<!tpu.dma_semaphore, #tpu.memory_space<semaphore_mem>>)
      %c0_i32_78 = arith.constant 0 : i32
      %138 = tpu.memref_slice %arg25[%c0_i32_78] : memref<2x!tpu.dma_semaphore, #tpu.memory_space<semaphore_mem>> -> memref<1x!tpu.dma_semaphore, #tpu.memory_space<semaphore_mem>>
      %139 = tpu.memref_squeeze %138 : memref<1x!tpu.dma_semaphore, #tpu.memory_space<semaphore_mem>> -> memref<!tpu.dma_semaphore, #tpu.memory_space<semaphore_mem>>
      tpu.wait_dma2 semaphore(%139 : memref<!tpu.dma_semaphore, #tpu.memory_space<semaphore_mem>>) src(%arg19 : memref<128x2xf32, #tpu.memory_space<any>>) dst(%arg23 : memref<128x2xf32, #tpu.memory_space<vmem>>)
      %c1_i32_79 = arith.constant 1 : i32
      %140 = tpu.memref_slice %arg25[%c1_i32_79] : memref<2x!tpu.dma_semaphore, #tpu.memory_space<semaphore_mem>> -> memref<1x!tpu.dma_semaphore, #tpu.memory_space<semaphore_mem>>
      %141 = tpu.memref_squeeze %140 : memref<1x!tpu.dma_semaphore, #tpu.memory_space<semaphore_mem>> -> memref<!tpu.dma_semaphore, #tpu.memory_space<semaphore_mem>>
      tpu.wait_dma2 semaphore(%141 : memref<!tpu.dma_semaphore, #tpu.memory_space<semaphore_mem>>) src(%arg20 : memref<1x2xf32, #tpu.memory_space<any>>) dst(%arg24 : memref<1x2xf32, #tpu.memory_space<vmem>>)
      %c0_80 = arith.constant 0 : index
      %c0_81 = arith.constant 0 : index
      %c0_82 = arith.constant 0 : index
      %142 = vector.load %arg22[%c0_80, %c0_81, %c0_82] : memref<2x16x128xf32, #tpu.memory_space<vmem>>, vector<2x16x128xf32>
      %cst_83 = arith.constant dense<0.000000e+00> : vector<2x128xf32>
      %143 = vector.multi_reduction <add>, %142, %cst_83 [1] : vector<2x16x128xf32> to vector<2x128xf32>
      %cst_84 = arith.constant 1.600000e+01 : f32
      %144 = vector.broadcast %cst_84 : f32 to vector<2x128xf32>
      %145 = arith.divf %143, %144 : vector<2x128xf32>
      %c0_85 = arith.constant 0 : index
      %c0_86 = arith.constant 0 : index
      %146 = vector.load %arg23[%c0_85, %c0_86] : memref<128x2xf32, #tpu.memory_space<vmem>>, vector<128x2xf32>
      %cst_87 = arith.constant dense<0.000000e+00> : vector<2x2xf32>
      %147 = tpu.matmul %145, %146, %cst_87 {dimension_numbers = #tpu.dot_dimension_numbers<[1], [0], [0], [1], [0, 0, 1, 1], [], []>} : vector<2x128xf32>, vector<128x2xf32>, vector<2x2xf32> -> vector<2x2xf32>
      %c0_88 = arith.constant 0 : index
      %c0_89 = arith.constant 0 : index
      %148 = vector.load %arg24[%c0_88, %c0_89] : memref<1x2xf32, #tpu.memory_space<vmem>>, vector<1x2xf32>
      %149 = vector.broadcast %148 : vector<1x2xf32> to vector<2x2xf32>
      %150 = arith.addf %147, %149 : vector<2x2xf32>
      %c0_90 = arith.constant 0 : index
      %c0_91 = arith.constant 0 : index
      %151 = vector.load %arg21[%c0_90, %c0_91] : memref<2x2xf32, #tpu.memory_space<vmem>>, vector<2x2xf32>
      tpu.vector_store %arg21[%c0_90, %c0_91], %150 {strides = array<i32>} : memref<2x2xf32, #tpu.memory_space<vmem>>, vector<2x2xf32>,
    } else {
    }
    return
  }
  func.func @transform_1(%arg0: i32, %arg1: i32) -> (i32, i32, i32) {
    %c0_i32 = arith.constant 0 : i32
    %c0_i32_0 = arith.constant 0 : i32
    %c0_i32_1 = arith.constant 0 : i32
    return %arg1, %c0_i32, %c0_i32_0 : i32, i32, i32
  }
  func.func @transform_2(%arg0: i32, %arg1: i32) -> (i32, i32, i32) {
    %c0_i32 = arith.constant 0 : i32
    %c0_i32_0 = arith.constant 0 : i32
    %c0_i32_1 = arith.constant 0 : i32
    return %arg1, %c0_i32, %c0_i32_0 : i32, i32, i32
  }
  func.func @transform_3(%arg0: i32, %arg1: i32) -> (i32, i32, i32) {
    %c0_i32 = arith.constant 0 : i32
    %c0_i32_0 = arith.constant 0 : i32
    %c0_i32_1 = arith.constant 0 : i32
    return %arg1, %c0_i32, %c0_i32_0 : i32, i32, i32
  }
  func.func @transform_4(%arg0: i32, %arg1: i32) -> (i32, i32, i32) {
    %c0_i32 = arith.constant 0 : i32
    %c0_i32_0 = arith.constant 0 : i32
    %c0_i32_1 = arith.constant 0 : i32
    return %arg1, %c0_i32, %c0_i32_0 : i32, i32, i32
  }
  func.func @transform_5(%arg0: i32, %arg1: i32) -> (i32, i32, i32) {
    %c0_i32 = arith.constant 0 : i32
    %c0_i32_0 = arith.constant 0 : i32
    %c0_i32_1 = arith.constant 0 : i32
    return %arg1, %c0_i32, %c0_i32_0 : i32, i32, i32
  }
  func.func @transform_6(%arg0: i32, %arg1: i32) -> (i32, i32, i32) {
    %c0_i32 = arith.constant 0 : i32
    %c0_i32_0 = arith.constant 0 : i32
    %c0_i32_1 = arith.constant 0 : i32
    return %arg1, %c0_i32, %c0_i32_0 : i32, i32, i32
  }
  func.func @transform_7(%arg0: i32, %arg1: i32) -> (i32, i32, i32) {
    %c0_i32 = arith.constant 0 : i32
    %c0_i32_0 = arith.constant 0 : i32
    %c0_i32_1 = arith.constant 0 : i32
    return %arg1, %c0_i32, %c0_i32_0 : i32, i32, i32
  }
  func.func @transform_8(%arg0: i32, %arg1: i32) -> (i32, i32, i32) {
    %c0_i32 = arith.constant 0 : i32
    %c0_i32_0 = arith.constant 0 : i32
    %c0_i32_1 = arith.constant 0 : i32
    return %arg1, %c0_i32, %c0_i32_0 : i32, i32, i32
  }
  func.func @transform_9(%arg0: i32, %arg1: i32) -> (i32, i32, i32) {
    %c0_i32 = arith.constant 0 : i32
    %c0_i32_0 = arith.constant 0 : i32
    %c0_i32_1 = arith.constant 0 : i32
    return %arg1, %c0_i32, %c0_i32_0 : i32, i32, i32
  }
  func.func @transform_10(%arg0: i32, %arg1: i32) -> (i32, i32, i32) {
    %c0_i32 = arith.constant 0 : i32
    %c0_i32_0 = arith.constant 0 : i32
    %c0_i32_1 = arith.constant 0 : i32
    return %arg1, %c0_i32, %c0_i32_0 : i32, i32, i32
  }
  func.func @transform_11(%arg0: i32, %arg1: i32) -> (i32, i32, i32) {
    %c0_i32 = arith.constant 0 : i32
    %c0_i32_0 = arith.constant 0 : i32
    %c0_i32_1 = arith.constant 0 : i32
    return %arg1, %c0_i32, %c0_i32_0 : i32, i32, i32
  }
  func.func @transform_12(%arg0: i32, %arg1: i32) -> (i32, i32, i32) {
    %c0_i32 = arith.constant 0 : i32
    %c0_i32_0 = arith.constant 0 : i32
    %c0_i32_1 = arith.constant 0 : i32
    return %arg1, %c0_i32, %c0_i32_0 : i32, i32, i32
  }
  func.func @transform_13(%arg0: i32, %arg1: i32) -> (i32, i32, i32) {
    %c0_i32 = arith.constant 0 : i32
    %c0_i32_0 = arith.constant 0 : i32
    %c0_i32_1 = arith.constant 0 : i32
    return %arg1, %c0_i32, %c0_i32_0 : i32, i32, i32
  }
  func.func @transform_14(%arg0: i32, %arg1: i32) -> (i32, i32, i32) {
    %c0_i32 = arith.constant 0 : i32
    %c0_i32_0 = arith.constant 0 : i32
    %c0_i32_1 = arith.constant 0 : i32
    return %arg1, %c0_i32, %c0_i32_0 : i32, i32, i32
  }
  func.func @transform_15(%arg0: i32, %arg1: i32) -> (i32, i32, i32) {
    %c0_i32 = arith.constant 0 : i32
    %c0_i32_0 = arith.constant 0 : i32
    %c0_i32_1 = arith.constant 0 : i32
    return %arg1, %c0_i32, %c0_i32_0 : i32, i32, i32
  }
  func.func @transform_16(%arg0: i32, %arg1: i32) -> (i32, i32, i32) {
    %c0_i32 = arith.constant 0 : i32
    %c0_i32_0 = arith.constant 0 : i32
    %c0_i32_1 = arith.constant 0 : i32
    return %arg1, %c0_i32, %c0_i32_0 : i32, i32, i32
  }
  func.func @transform_19(%arg0: i32, %arg1: i32) -> (i32, i32) {
    %c0_i32 = arith.constant 0 : i32
    %c0_i32_0 = arith.constant 0 : i32
    return %arg0, %c0_i32 : i32, i32
  }
}

</mosaic_0001>

<llo_original>
// kernel: tpu_custom_call.1
$region0: #{tpu_custom_call.1}
  #allocation0 [shape = 'u32[]', space=smem, size = 0x4, offset = 0x4, fixed_abs, tag = 'smem constant byte address 0x4 - core index']
  #allocation1 [shape = 'u32[72,128]{1,0:T(1,128)}', space=vmem, size = 0x9000, scoped, tag = 'internal scratch']
  #allocation2 [shape = 'f32[2,16,128]{2,1,0:T(8,128)}', space=vmem, size = 0x4000, scoped, tag = 'scratch operand']
  #allocation3 [shape = 'f32[128,2]{1,0:T(8,128)}', space=vmem, size = 0x10000, scoped, tag = 'scratch operand']
  #allocation4 [shape = 'f32[1,2]{1,0:T(1,128)}', space=vmem, size = 0x200, scoped, tag = 'scratch operand']
  #allocation5 [shape = 's32[2]{0}', space=sflag, size = 0x8, scoped, tag = 'scratch operand']
  #allocation12 [shape = 's32[]', space=sflag, size = 0x4, offset = 0, fixed_abs, tag = 'sflag constant byte address 0x0 - dummy sync flag']
  #allocation13 [shape = 's32[]', space=sflag, size = 0x4, offset = 0, fixed_abs, tag = 'sflag constant byte address 0x0 - dummy sync flag']
  #allocation14 [shape = 's32[]', space=sflag, size = 0x4, offset = 0, fixed_abs, tag = 'sflag constant byte address 0x0 - dummy sync flag']
  %s0 = inlined_call_operand.vmem [shape: f32[2,16,128], index: 0, kind: input, shape index: {}]
  %s1 = inlined_call_operand.vmem [shape: bf16[2,128,32], index: 1, kind: input, shape index: {}]
  %s2 = inlined_call_operand.vmem [shape: bf16[2,128,32], index: 2, kind: input, shape index: {}]
  %s3 = inlined_call_operand.vmem [shape: bf16[2,128,32], index: 3, kind: input, shape index: {}]
  %s4 = inlined_call_operand.vmem [shape: f32[2,1,32], index: 4, kind: input, shape index: {}]
  %s5 = inlined_call_operand.vmem [shape: f32[2,1,32], index: 5, kind: input, shape index: {}]
  %s6 = inlined_call_operand.vmem [shape: f32[2,1,32], index: 6, kind: input, shape index: {}]
  %s7 = inlined_call_operand.vmem [shape: bf16[2,32,128], index: 7, kind: input, shape index: {}]
  %s8 = inlined_call_operand.vmem [shape: f32[2,1,128], index: 8, kind: input, shape index: {}]
  %s9 = inlined_call_operand.vmem [shape: f32[2,1,128], index: 9, kind: input, shape index: {}]
  %s10 = inlined_call_operand.vmem [shape: f32[2,1,128], index: 10, kind: input, shape index: {}]
  %s11 = inlined_call_operand.hbm [shape: bf16[2,128,512], index: 11, kind: input, shape index: {}]
  %s12 = inlined_call_operand.vmem [shape: f32[2,1,512], index: 12, kind: input, shape index: {}]
  %s13 = inlined_call_operand.hbm [shape: bf16[2,512,128], index: 13, kind: input, shape index: {}]
  %s14 = inlined_call_operand.vmem [shape: f32[2,1,128], index: 14, kind: input, shape index: {}]
  %s15 = inlined_call_operand.vmem [shape: f32[2,1,128], index: 15, kind: input, shape index: {}]
  %s16 = inlined_call_operand.vmem [shape: f32[2,1,128], index: 16, kind: input, shape index: {}]
  %s17 = inlined_call_operand.vmem [shape: f32[128,2], index: 17, kind: input, shape index: {}]
  %s18 = inlined_call_operand.vmem [shape: f32[1,2], index: 18, kind: input, shape index: {}]
  %s19 = inlined_call_operand.hbm [shape: f32[2,2], index: 19, kind: output, shape index: {}]
  %s20 = sld [smem:[#allocation0]]
  $region181: #{tpu_custom_call.1} parent=0
    _
  %s22 = ssub.s32 1, %s20
  %s23 = scalar_select 0, %s22, %s20
  $region1: #{tpu_custom_call.1} parent=0
    #allocation6 [shape = 'u8[262144]{0}', space=vmem, size = 0x40000, scoped, tag = 'input window, operand 11']
    #allocation7 [shape = 's32[2]{0}', space=sflag, size = 0x8, scoped, tag = 'scoped memory for tpu_custom_call.1']
    #allocation8 [shape = 's32[2]{0}', space=sflag, size = 0x8, scoped, tag = 'scoped memory for tpu_custom_call.1']
    #allocation9 [shape = 'u8[262144]{0}', space=vmem, size = 0x40000, scoped, tag = 'input window, operand 13']
    #allocation10 [shape = 's32[2]{0}', space=sflag, size = 0x8, scoped, tag = 'scoped memory for tpu_custom_call.1']
    #allocation11 [shape = 'u8[1024]{0}', space=vmem, size = 0x400, scoped, tag = 'output window, operand 0, single buffered']
    %24 = vsyncpa [#allocation7], 0
    %s25 = scalar_lea.sflag [#allocation7], 1
    %26 = vsyncpa %s25, 0
    %27 = vsyncpa [#allocation10], 0
    %s28 = scalar_lea.sflag [#allocation10], 1
    %29 = vsyncpa %s28, 0
    %30 = vsyncpa [#allocation8], 0
    loop: start=0, step=1, limit=4
    $region2: #{tpu_custom_call.1} parent=1 // loop_pre_header
      _
    $region3: #{tpu_custom_call.1} parent=1 // loop_header
      %s32 = sphi 0, %s36
      %p33 = scmp.ge.s32.totalorder %s32, 4
      %s39 = sphi 0, %s51
      %s40 = sphi 0, %s47
      %s41 = sphi 0, %s39
      %s42 = sphi 0, %s40
      %s43 = sphi 0, %s41
      %s44 = sphi 0, %s42
      %s54 = sphi 0, %s56
      %s57 = sphi 0, %s54
      %s58 = sphi 0, %s57
      %s74 = sphi 0, %s58
      %s80 = sphi 0, %s82
      %s83 = sphi 0, %s80
      %s84 = sphi 0, %s83
      %s100 = sphi 0, %s84
      %s106 = sphi 0, %s108
      %s109 = sphi 0, %s106
      %s110 = sphi 0, %s109
      %s126 = sphi 0, %s110
      %s132 = sphi 0, %s134
      %s135 = sphi 0, %s132
      %s136 = sphi 0, %s135
      %s152 = sphi 0, %s136
      %s158 = sphi 0, %s160
      %s161 = sphi 0, %s158
      %s162 = sphi 0, %s161
      %s178 = sphi 0, %s162
      %s184 = sphi 0, %s186
      %s187 = sphi 0, %s184
      %s188 = sphi 0, %s187
      %s204 = sphi 0, %s188
      %s210 = sphi 0, %s212
      %s213 = sphi 0, %s210
      %s214 = sphi 0, %s213
      %s230 = sphi 0, %s214
      %s236 = sphi 0, %s238
      %s239 = sphi 0, %s236
      %s240 = sphi 0, %s239
      %s256 = sphi 0, %s240
      %s262 = sphi 0, %s264
      %s265 = sphi 0, %s262
      %s266 = sphi 0, %s265
      %s282 = sphi 0, %s266
      %s288 = sphi 0, %s290
      %s291 = sphi 0, %s288
      %s292 = sphi 0, %s291
      %s308 = sphi 0, %s292
      %s314 = sphi 0, %s316
      %s317 = sphi 0, %s314
      %s318 = sphi 0, %s317
      %s334 = sphi 0, %s318
      %s340 = sphi 0, %s342
      %s343 = sphi 0, %s340
      %s344 = sphi 0, %s343
      %s360 = sphi 0, %s344
      %s366 = sphi 0, %s368
      %s369 = sphi 0, %s366
      %s370 = sphi 0, %s369
      %s386 = sphi 0, %s370
      %s392 = sphi 0, %s394
      %s395 = sphi 0, %s392
      %s396 = sphi 0, %s395
      %s412 = sphi 0, %s396
      %s418 = sphi 0, %s420
      %s421 = sphi 0, %s418
      %s422 = sphi 0, %s421
      %s438 = sphi 0, %s422
      %s444 = sphi 0, %s446
      %s447 = sphi 0, %s444
      %s448 = sphi 0, %s447
      %s464 = sphi 0, %s448
      %s470 = sphi 0, %s472
      %s473 = sphi 0, %s470
      %s474 = sphi 0, %s473
      %s490 = sphi 0, %s474
    $region4: #{tpu_custom_call.1} parent=1 // loop_header_branch
      %35 = sbr.rel (%p33) target = $region8
    $region5: #{tpu_custom_call.1} parent=1 // loop_body
      %s37 = ssub.s32 %s32, 1
      %s38 = ssub.s32 %s32, 2
      %s45 = sadd.s32 1, %s40
      %p46 = scmp.ge.s32.totalorder %s45, 2
      %s47 = scalar_select %p46, 0, %s45
      %s48 = sadd.s32 1, %s39
      %s49 = scalar_select %p46, %s48, %s39
      %p50 = scmp.ge.s32.totalorder %s49, 1
      %s51 = scalar_select %p50, 0, %s49
      %s52 = ssub.s32 %s40, %s47
      %p53 = scmp.eq.s32.totalorder %s52, 0
      %s55 = sadd.s32 %s54, 1
      %s56 = scalar_select %p53, %s54, %s55
      %p59 = pneg %p53
      %p60 = scmp.eq.s32.totalorder %s32, 1
      %p61 = por %p59, %p60
      %p62 = scmp.ne.s32.totalorder %s54, %s57
      %p63 = scmp.eq.s32.totalorder %s32, 0
      %p64 = por %p62, %p63
      %p65 = scmp.ne.s32.totalorder %s54, %s57
      %p66 = scmp.eq.s32.totalorder %s37, 1
      %p67 = por %p65, %p66
      %p68 = scmp.ne.s32.totalorder %s57, %s58
      %p69 = scmp.eq.s32.totalorder %s37, 0
      %p70 = por %p68, %p69
      %p71 = scmp.ne.s32.totalorder %s57, %s58
      %p72 = scmp.eq.s32.totalorder %s38, 1
      %p73 = por %p71, %p72
      %p75 = scmp.ne.s32.totalorder %s58, %s74
      %p76 = scmp.eq.s32.totalorder %s38, 0
      %p77 = por %p75, %p76
      %s78 = ssub.s32 %s40, %s47
      %p79 = scmp.eq.s32.totalorder %s78, 0
      %s81 = sadd.s32 %s80, 1
      %s82 = scalar_select %p79, %s80, %s81
      %p85 = pneg %p79
      %p86 = scmp.eq.s32.totalorder %s32, 1
      %p87 = por %p85, %p86
      %p88 = scmp.ne.s32.totalorder %s80, %s83
      %p89 = scmp.eq.s32.totalorder %s32, 0
      %p90 = por %p88, %p89
      %p91 = scmp.ne.s32.totalorder %s80, %s83
      %p92 = scmp.eq.s32.totalorder %s37, 1
      %p93 = por %p91, %p92
      %p94 = scmp.ne.s32.totalorder %s83, %s84
      %p95 = scmp.eq.s32.totalorder %s37, 0
      %p96 = por %p94, %p95
      %p97 = scmp.ne.s32.totalorder %s83, %s84
      %p98 = scmp.eq.s32.totalorder %s38, 1
      %p99 = por %p97, %p98
      %p101 = scmp.ne.s32.totalorder %s84, %s100
      %p102 = scmp.eq.s32.totalorder %s38, 0
      %p103 = por %p101, %p102
      %s104 = ssub.s32 %s40, %s47
      %p105 = scmp.eq.s32.totalorder %s104, 0
      %s107 = sadd.s32 %s106, 1
      %s108 = scalar_select %p105, %s106, %s107
      %p111 = pneg %p105
      %p112 = scmp.eq.s32.totalorder %s32, 1
      %p113 = por %p111, %p112
      %p114 = scmp.ne.s32.totalorder %s106, %s109
      %p115 = scmp.eq.s32.totalorder %s32, 0
      %p116 = por %p114, %p115
      %p117 = scmp.ne.s32.totalorder %s106, %s109
      %p118 = scmp.eq.s32.totalorder %s37, 1
      %p119 = por %p117, %p118
      %p120 = scmp.ne.s32.totalorder %s109, %s110
      %p121 = scmp.eq.s32.totalorder %s37, 0
      %p122 = por %p120, %p121
      %p123 = scmp.ne.s32.totalorder %s109, %s110
      %p124 = scmp.eq.s32.totalorder %s38, 1
      %p125 = por %p123, %p124
      %p127 = scmp.ne.s32.totalorder %s110, %s126
      %p128 = scmp.eq.s32.totalorder %s38, 0
      %p129 = por %p127, %p128
      %s130 = ssub.s32 %s40, %s47
      %p131 = scmp.eq.s32.totalorder %s130, 0
      %s133 = sadd.s32 %s132, 1
      %s134 = scalar_select %p131, %s132, %s133
      %p137 = pneg %p131
      %p138 = scmp.eq.s32.totalorder %s32, 1
      %p139 = por %p137, %p138
      %p140 = scmp.ne.s32.totalorder %s132, %s135
      %p141 = scmp.eq.s32.totalorder %s32, 0
      %p142 = por %p140, %p141
      %p143 = scmp.ne.s32.totalorder %s132, %s135
      %p144 = scmp.eq.s32.totalorder %s37, 1
      %p145 = por %p143, %p144
      %p146 = scmp.ne.s32.totalorder %s135, %s136
      %p147 = scmp.eq.s32.totalorder %s37, 0
      %p148 = por %p146, %p147
      %p149 = scmp.ne.s32.totalorder %s135, %s136
      %p150 = scmp.eq.s32.totalorder %s38, 1
      %p151 = por %p149, %p150
      %p153 = scmp.ne.s32.totalorder %s136, %s152
      %p154 = scmp.eq.s32.totalorder %s38, 0
      %p155 = por %p153, %p154
      %s156 = ssub.s32 %s40, %s47
      %p157 = scmp.eq.s32.totalorder %s156, 0
      %s159 = sadd.s32 %s158, 1
      %s160 = scalar_select %p157, %s158, %s159
      %p163 = pneg %p157
      %p164 = scmp.eq.s32.totalorder %s32, 1
      %p165 = por %p163, %p164
      %p166 = scmp.ne.s32.totalorder %s158, %s161
      %p167 = scmp.eq.s32.totalorder %s32, 0
      %p168 = por %p166, %p167
      %p169 = scmp.ne.s32.totalorder %s158, %s161
      %p170 = scmp.eq.s32.totalorder %s37, 1
      %p171 = por %p169, %p170
      %p172 = scmp.ne.s32.totalorder %s161, %s162
      %p173 = scmp.eq.s32.totalorder %s37, 0
      %p174 = por %p172, %p173
      %p175 = scmp.ne.s32.totalorder %s161, %s162
      %p176 = scmp.eq.s32.totalorder %s38, 1
      %p177 = por %p175, %p176
      %p179 = scmp.ne.s32.totalorder %s162, %s178
      %p180 = scmp.eq.s32.totalorder %s38, 0
      %p181 = por %p179, %p180
      %s182 = ssub.s32 %s40, %s47
      %p183 = scmp.eq.s32.totalorder %s182, 0
      %s185 = sadd.s32 %s184, 1
      %s186 = scalar_select %p183, %s184, %s185
      %p189 = pneg %p183
      %p190 = scmp.eq.s32.totalorder %s32, 1
      %p191 = por %p189, %p190
      %p192 = scmp.ne.s32.totalorder %s184, %s187
      %p193 = scmp.eq.s32.totalorder %s32, 0
      %p194 = por %p192, %p193
      %p195 = scmp.ne.s32.totalorder %s184, %s187
      %p196 = scmp.eq.s32.totalorder %s37, 1
      %p197 = por %p195, %p196
      %p198 = scmp.ne.s32.totalorder %s187, %s188
      %p199 = scmp.eq.s32.totalorder %s37, 0
      %p200 = por %p198, %p199
      %p201 = scmp.ne.s32.totalorder %s187, %s188
      %p202 = scmp.eq.s32.totalorder %s38, 1
      %p203 = por %p201, %p202
      %p205 = scmp.ne.s32.totalorder %s188, %s204
      %p206 = scmp.eq.s32.totalorder %s38, 0
      %p207 = por %p205, %p206
      %s208 = ssub.s32 %s40, %s47
      %p209 = scmp.eq.s32.totalorder %s208, 0
      %s211 = sadd.s32 %s210, 1
      %s212 = scalar_select %p209, %s210, %s211
      %p215 = pneg %p209
      %p216 = scmp.eq.s32.totalorder %s32, 1
      %p217 = por %p215, %p216
      %p218 = scmp.ne.s32.totalorder %s210, %s213
      %p219 = scmp.eq.s32.totalorder %s32, 0
      %p220 = por %p218, %p219
      %p221 = scmp.ne.s32.totalorder %s210, %s213
      %p222 = scmp.eq.s32.totalorder %s37, 1
      %p223 = por %p221, %p222
      %p224 = scmp.ne.s32.totalorder %s213, %s214
      %p225 = scmp.eq.s32.totalorder %s37, 0
      %p226 = por %p224, %p225
      %p227 = scmp.ne.s32.totalorder %s213, %s214
      %p228 = scmp.eq.s32.totalorder %s38, 1
      %p229 = por %p227, %p228
      %p231 = scmp.ne.s32.totalorder %s214, %s230
      %p232 = scmp.eq.s32.totalorder %s38, 0
      %p233 = por %p231, %p232
      %s234 = ssub.s32 %s40, %s47
      %p235 = scmp.eq.s32.totalorder %s234, 0
      %s237 = sadd.s32 %s236, 1
      %s238 = scalar_select %p235, %s236, %s237
      %p241 = pneg %p235
      %p242 = scmp.eq.s32.totalorder %s32, 1
      %p243 = por %p241, %p242
      %p244 = scmp.ne.s32.totalorder %s236, %s239
      %p245 = scmp.eq.s32.totalorder %s32, 0
      %p246 = por %p244, %p245
      %p247 = scmp.ne.s32.totalorder %s236, %s239
      %p248 = scmp.eq.s32.totalorder %s37, 1
      %p249 = por %p247, %p248
      %p250 = scmp.ne.s32.totalorder %s239, %s240
      %p251 = scmp.eq.s32.totalorder %s37, 0
      %p252 = por %p250, %p251
      %p253 = scmp.ne.s32.totalorder %s239, %s240
      %p254 = scmp.eq.s32.totalorder %s38, 1
      %p255 = por %p253, %p254
      %p257 = scmp.ne.s32.totalorder %s240, %s256
      %p258 = scmp.eq.s32.totalorder %s38, 0
      %p259 = por %p257, %p258
      %s260 = ssub.s32 %s40, %s47
      %p261 = scmp.eq.s32.totalorder %s260, 0
      %s263 = sadd.s32 %s262, 1
      %s264 = scalar_select %p261, %s262, %s263
      %p267 = pneg %p261
      %p268 = scmp.eq.s32.totalorder %s32, 1
      %p269 = por %p267, %p268
      %p270 = scmp.ne.s32.totalorder %s262, %s265
      %p271 = scmp.eq.s32.totalorder %s32, 0
      %p272 = por %p270, %p271
      %p273 = scmp.ne.s32.totalorder %s262, %s265
      %p274 = scmp.eq.s32.totalorder %s37, 1
      %p275 = por %p273, %p274
      %p276 = scmp.ne.s32.totalorder %s265, %s266
      %p277 = scmp.eq.s32.totalorder %s37, 0
      %p278 = por %p276, %p277
      %p279 = scmp.ne.s32.totalorder %s265, %s266
      %p280 = scmp.eq.s32.totalorder %s38, 1
      %p281 = por %p279, %p280
      %p283 = scmp.ne.s32.totalorder %s266, %s282
      %p284 = scmp.eq.s32.totalorder %s38, 0
      %p285 = por %p283, %p284
      %s286 = ssub.s32 %s40, %s47
      %p287 = scmp.eq.s32.totalorder %s286, 0
      %s289 = sadd.s32 %s288, 1
      %s290 = scalar_select %p287, %s288, %s289
      %p293 = pneg %p287
      %p294 = scmp.eq.s32.totalorder %s32, 1
      %p295 = por %p293, %p294
      %p296 = scmp.ne.s32.totalorder %s288, %s291
      %p297 = scmp.eq.s32.totalorder %s32, 0
      %p298 = por %p296, %p297
      %p299 = scmp.ne.s32.totalorder %s288, %s291
      %p300 = scmp.eq.s32.totalorder %s37, 1
      %p301 = por %p299, %p300
      %p302 = scmp.ne.s32.totalorder %s291, %s292
      %p303 = scmp.eq.s32.totalorder %s37, 0
      %p304 = por %p302, %p303
      %p305 = scmp.ne.s32.totalorder %s291, %s292
      %p306 = scmp.eq.s32.totalorder %s38, 1
      %p307 = por %p305, %p306
      %p309 = scmp.ne.s32.totalorder %s292, %s308
      %p310 = scmp.eq.s32.totalorder %s38, 0
      %p311 = por %p309, %p310
      %s312 = ssub.s32 %s40, %s47
      %p313 = scmp.eq.s32.totalorder %s312, 0
      %s315 = sadd.s32 %s314, 1
      %s316 = scalar_select %p313, %s314, %s315
      %p319 = pneg %p313
      %p320 = scmp.eq.s32.totalorder %s32, 1
      %p321 = por %p319, %p320
      %p322 = scmp.ne.s32.totalorder %s314, %s317
      %p323 = scmp.eq.s32.totalorder %s32, 0
      %p324 = por %p322, %p323
      %p325 = scmp.ne.s32.totalorder %s314, %s317
      %p326 = scmp.eq.s32.totalorder %s37, 1
      %p327 = por %p325, %p326
      %p328 = scmp.ne.s32.totalorder %s317, %s318
      %p329 = scmp.eq.s32.totalorder %s37, 0
      %p330 = por %p328, %p329
      %p331 = scmp.ne.s32.totalorder %s317, %s318
      %p332 = scmp.eq.s32.totalorder %s38, 1
      %p333 = por %p331, %p332
      %p335 = scmp.ne.s32.totalorder %s318, %s334
      %p336 = scmp.eq.s32.totalorder %s38, 0
      %p337 = por %p335, %p336
      %s338 = ssub.s32 %s40, %s47
      %p339 = scmp.eq.s32.totalorder %s338, 0
      %s341 = sadd.s32 %s340, 1
      %s342 = scalar_select %p339, %s340, %s341
      %p345 = pneg %p339
      %p346 = scmp.eq.s32.totalorder %s32, 1
      %p347 = por %p345, %p346
      %p348 = scmp.ne.s32.totalorder %s340, %s343
      %p349 = scmp.eq.s32.totalorder %s32, 0
      %p350 = por %p348, %p349
      %p351 = scmp.ne.s32.totalorder %s340, %s343
      %p352 = scmp.eq.s32.totalorder %s37, 1
      %p353 = por %p351, %p352
      %p354 = scmp.ne.s32.totalorder %s343, %s344
      %p355 = scmp.eq.s32.totalorder %s37, 0
      %p356 = por %p354, %p355
      %p357 = scmp.ne.s32.totalorder %s343, %s344
      %p358 = scmp.eq.s32.totalorder %s38, 1
      %p359 = por %p357, %p358
      %p361 = scmp.ne.s32.totalorder %s344, %s360
      %p362 = scmp.eq.s32.totalorder %s38, 0
      %p363 = por %p361, %p362
      %s364 = ssub.s32 %s40, %s47
      %p365 = scmp.eq.s32.totalorder %s364, 0
      %s367 = sadd.s32 %s366, 1
      %s368 = scalar_select %p365, %s366, %s367
      %p371 = pneg %p365
      %p372 = scmp.eq.s32.totalorder %s32, 1
      %p373 = por %p371, %p372
      %p374 = scmp.ne.s32.totalorder %s366, %s369
      %p375 = scmp.eq.s32.totalorder %s32, 0
      %p376 = por %p374, %p375
      %p377 = scmp.ne.s32.totalorder %s366, %s369
      %p378 = scmp.eq.s32.totalorder %s37, 1
      %p379 = por %p377, %p378
      %p380 = scmp.ne.s32.totalorder %s369, %s370
      %p381 = scmp.eq.s32.totalorder %s37, 0
      %p382 = por %p380, %p381
      %p383 = scmp.ne.s32.totalorder %s369, %s370
      %p384 = scmp.eq.s32.totalorder %s38, 1
      %p385 = por %p383, %p384
      %p387 = scmp.ne.s32.totalorder %s370, %s386
      %p388 = scmp.eq.s32.totalorder %s38, 0
      %p389 = por %p387, %p388
      %s390 = ssub.s32 %s40, %s47
      %p391 = scmp.eq.s32.totalorder %s390, 0
      %s393 = sadd.s32 %s392, 1
      %s394 = scalar_select %p391, %s392, %s393
      %p397 = pneg %p391
      %p398 = scmp.eq.s32.totalorder %s32, 1
      %p399 = por %p397, %p398
      %p400 = scmp.ne.s32.totalorder %s392, %s395
      %p401 = scmp.eq.s32.totalorder %s32, 0
      %p402 = por %p400, %p401
      %p403 = scmp.ne.s32.totalorder %s392, %s395
      %p404 = scmp.eq.s32.totalorder %s37, 1
      %p405 = por %p403, %p404
      %p406 = scmp.ne.s32.totalorder %s395, %s396
      %p407 = scmp.eq.s32.totalorder %s37, 0
      %p408 = por %p406, %p407
      %p409 = scmp.ne.s32.totalorder %s395, %s396
      %p410 = scmp.eq.s32.totalorder %s38, 1
      %p411 = por %p409, %p410
      %p413 = scmp.ne.s32.totalorder %s396, %s412
      %p414 = scmp.eq.s32.totalorder %s38, 0
      %p415 = por %p413, %p414
      %s416 = ssub.s32 %s40, %s47
      %p417 = scmp.eq.s32.totalorder %s416, 0
      %s419 = sadd.s32 %s418, 1
      %s420 = scalar_select %p417, %s418, %s419
      %p423 = pneg %p417
      %p424 = scmp.eq.s32.totalorder %s32, 1
      %p425 = por %p423, %p424
      %p426 = scmp.ne.s32.totalorder %s418, %s421
      %p427 = scmp.eq.s32.totalorder %s32, 0
      %p428 = por %p426, %p427
      %p429 = scmp.ne.s32.totalorder %s418, %s421
      %p430 = scmp.eq.s32.totalorder %s37, 1
      %p431 = por %p429, %p430
      %p432 = scmp.ne.s32.totalorder %s421, %s422
      %p433 = scmp.eq.s32.totalorder %s37, 0
      %p434 = por %p432, %p433
      %p435 = scmp.ne.s32.totalorder %s421, %s422
      %p436 = scmp.eq.s32.totalorder %s38, 1
      %p437 = por %p435, %p436
      %p439 = scmp.ne.s32.totalorder %s422, %s438
      %p440 = scmp.eq.s32.totalorder %s38, 0
      %p441 = por %p439, %p440
      %s442 = ssub.s32 %s40, %s47
      %p443 = scmp.eq.s32.totalorder %s442, 0
      %s445 = sadd.s32 %s444, 1
      %s446 = scalar_select %p443, %s444, %s445
      %p449 = pneg %p443
      %p450 = scmp.eq.s32.totalorder %s32, 1
      %p451 = por %p449, %p450
      %p452 = scmp.ne.s32.totalorder %s444, %s447
      %p453 = scmp.eq.s32.totalorder %s32, 0
      %p454 = por %p452, %p453
      %p455 = scmp.ne.s32.totalorder %s444, %s447
      %p456 = scmp.eq.s32.totalorder %s37, 1
      %p457 = por %p455, %p456
      %p458 = scmp.ne.s32.totalorder %s447, %s448
      %p459 = scmp.eq.s32.totalorder %s37, 0
      %p460 = por %p458, %p459
      %p461 = scmp.ne.s32.totalorder %s447, %s448
      %p462 = scmp.eq.s32.totalorder %s38, 1
      %p463 = por %p461, %p462
      %p465 = scmp.ne.s32.totalorder %s448, %s464
      %p466 = scmp.eq.s32.totalorder %s38, 0
      %p467 = por %p465, %p466
      %s468 = ssub.s32 %s39, %s51
      %p469 = scmp.eq.s32.totalorder %s468, 0
      %s471 = sadd.s32 %s470, 1
      %s472 = scalar_select %p469, %s470, %s471
      %p475 = pneg %p469
      %p476 = scmp.eq.s32.totalorder %s32, 1
      %p477 = por %p475, %p476
      %p478 = scmp.ne.s32.totalorder %s470, %s473
      %p479 = scmp.eq.s32.totalorder %s32, 0
      %p480 = por %p478, %p479
      %p481 = scmp.ne.s32.totalorder %s470, %s473
      %p482 = scmp.eq.s32.totalorder %s37, 1
      %p483 = por %p481, %p482
      %p484 = scmp.ne.s32.totalorder %s473, %s474
      %p485 = scmp.eq.s32.totalorder %s37, 0
      %p486 = por %p484, %p485
      %p487 = scmp.ne.s32.totalorder %s473, %s474
      %p488 = scmp.eq.s32.totalorder %s38, 1
      %p489 = por %p487, %p488
      %p491 = scmp.ne.s32.totalorder %s474, %s490
      %p492 = scmp.eq.s32.totalorder %s38, 0
      %p493 = por %p491, %p492
      %p494 = scmp.le.s32.totalorder 1, %s32
      %p495 = scmp.lt.s32.totalorder %s32, 3
      %p496 = pnand %p494, %p495
      %p497 = pneg %p496
      // Predicated region
      $region9: #{tpu_custom_call.1} parent=5 // pred_check
        _
      $region10: #{tpu_custom_call.1} parent=5 // pred_check_branch
        %499 = sbr.rel (%p496) target = $region12
      $region11: #{tpu_custom_call.1} parent=5 // pred_region
        %s500 = ssub.s32 %s32, 1
      $region12: #{tpu_custom_call.1} parent=5 // pred_fallthru
        _
      %p501 = scmp.lt.s32.totalorder %s32, 2
      // Predicated region
      $region13: #{tpu_custom_call.1} parent=5 // pred_check
        %p502 = pneg %p501
      $region14: #{tpu_custom_call.1} parent=5 // pred_check_branch
        %504 = sbr.rel (%p502) target = $region16
      $region15: #{tpu_custom_call.1} parent=5 // pred_region
        // Predicated region
        $region17: #{tpu_custom_call.1} parent=15 // pred_check
          %p505 = pneg %p64
        $region18: #{tpu_custom_call.1} parent=15 // pred_check_branch
          %507 = sbr.rel (%p505) target = $region20
        $region19: #{tpu_custom_call.1} parent=15 // pred_region
          %p508 = scmp.lt.s32.totalorder %s40, 1
          %s509 = scalar_select %p508, %s40, 1
          %s510 = smul.addr %s509, 16
          %s511 = smul.addr %s510, 4
          %s512 = scalar_lea.vmem %s1, %s511
        $region20: #{tpu_custom_call.1} parent=15 // pred_fallthru
          _
        // Predicated region
        $region21: #{tpu_custom_call.1} parent=15 // pred_check
          %p513 = pneg %p90
        $region22: #{tpu_custom_call.1} parent=15 // pred_check_branch
          %515 = sbr.rel (%p513) target = $region24
        $region23: #{tpu_custom_call.1} parent=15 // pred_region
          %p516 = scmp.lt.s32.totalorder %s40, 1
          %s517 = scalar_select %p516, %s40, 1
          %s518 = smul.addr %s517, 16
          %s519 = smul.addr %s518, 4
          %s520 = scalar_lea.vmem %s2, %s519
        $region24: #{tpu_custom_call.1} parent=15 // pred_fallthru
          _
        // Predicated region
        $region25: #{tpu_custom_call.1} parent=15 // pred_check
          %p521 = pneg %p116
        $region26: #{tpu_custom_call.1} parent=15 // pred_check_branch
          %523 = sbr.rel (%p521) target = $region28
        $region27: #{tpu_custom_call.1} parent=15 // pred_region
          %p524 = scmp.lt.s32.totalorder %s40, 1
          %s525 = scalar_select %p524, %s40, 1
          %s526 = smul.addr %s525, 16
          %s527 = smul.addr %s526, 4
          %s528 = scalar_lea.vmem %s3, %s527
        $region28: #{tpu_custom_call.1} parent=15 // pred_fallthru
          _
        // Predicated region
        $region29: #{tpu_custom_call.1} parent=15 // pred_check
          %p529 = pneg %p142
        $region30: #{tpu_custom_call.1} parent=15 // pred_check_branch
          %531 = sbr.rel (%p529) target = $region32
        $region31: #{tpu_custom_call.1} parent=15 // pred_region
          %p532 = scmp.lt.s32.totalorder %s40, 1
          %s533 = scalar_select %p532, %s40, 1
          %s534 = scalar_lea.vmem %s4, %s533
        $region32: #{tpu_custom_call.1} parent=15 // pred_fallthru
          _
        // Predicated region
        $region33: #{tpu_custom_call.1} parent=15 // pred_check
          %p535 = pneg %p168
        $region34: #{tpu_custom_call.1} parent=15 // pred_check_branch
          %537 = sbr.rel (%p535) target = $region36
        $region35: #{tpu_custom_call.1} parent=15 // pred_region
          %p538 = scmp.lt.s32.totalorder %s40, 1
          %s539 = scalar_select %p538, %s40, 1
          %s540 = scalar_lea.vmem %s5, %s539
        $region36: #{tpu_custom_call.1} parent=15 // pred_fallthru
          _
        // Predicated region
        $region37: #{tpu_custom_call.1} parent=15 // pred_check
          %p541 = pneg %p194
        $region38: #{tpu_custom_call.1} parent=15 // pred_check_branch
          %543 = sbr.rel (%p541) target = $region40
        $region39: #{tpu_custom_call.1} parent=15 // pred_region
          %p544 = scmp.lt.s32.totalorder %s40, 1
          %s545 = scalar_select %p544, %s40, 1
          %s546 = scalar_lea.vmem %s6, %s545
        $region40: #{tpu_custom_call.1} parent=15 // pred_fallthru
          _
        // Predicated region
        $region41: #{tpu_custom_call.1} parent=15 // pred_check
          %p547 = pneg %p220
        $region42: #{tpu_custom_call.1} parent=15 // pred_check_branch
          %549 = sbr.rel (%p547) target = $region44
        $region43: #{tpu_custom_call.1} parent=15 // pred_region
          %p550 = scmp.lt.s32.totalorder %s40, 1
          %s551 = scalar_select %p550, %s40, 1
          %s552 = smul.addr %s551, 4
          %s553 = smul.addr %s552, 4
          %s554 = scalar_lea.vmem %s7, %s553
        $region44: #{tpu_custom_call.1} parent=15 // pred_fallthru
          _
        // Predicated region
        $region45: #{tpu_custom_call.1} parent=15 // pred_check
          %p555 = pneg %p246
        $region46: #{tpu_custom_call.1} parent=15 // pred_check_branch
          %557 = sbr.rel (%p555) target = $region48
        $region47: #{tpu_custom_call.1} parent=15 // pred_region
          %p558 = scmp.lt.s32.totalorder %s40, 1
          %s559 = scalar_select %p558, %s40, 1
          %s560 = scalar_lea.vmem %s8, %s559
        $region48: #{tpu_custom_call.1} parent=15 // pred_fallthru
          _
        // Predicated region
        $region49: #{tpu_custom_call.1} parent=15 // pred_check
          %p561 = pneg %p272
        $region50: #{tpu_custom_call.1} parent=15 // pred_check_branch
          %563 = sbr.rel (%p561) target = $region52
        $region51: #{tpu_custom_call.1} parent=15 // pred_region
          %p564 = scmp.lt.s32.totalorder %s40, 1
          %s565 = scalar_select %p564, %s40, 1
          %s566 = scalar_lea.vmem %s9, %s565
        $region52: #{tpu_custom_call.1} parent=15 // pred_fallthru
          _
        // Predicated region
        $region53: #{tpu_custom_call.1} parent=15 // pred_check
          %p567 = pneg %p298
        $region54: #{tpu_custom_call.1} parent=15 // pred_check_branch
          %569 = sbr.rel (%p567) target = $region56
        $region55: #{tpu_custom_call.1} parent=15 // pred_region
          %p570 = scmp.lt.s32.totalorder %s40, 1
          %s571 = scalar_select %p570, %s40, 1
          %s572 = scalar_lea.vmem %s10, %s571
        $region56: #{tpu_custom_call.1} parent=15 // pred_fallthru
          _
        // Predicated region
        $region57: #{tpu_custom_call.1} parent=15 // pred_check
          %p573 = pneg %p324
        $region58: #{tpu_custom_call.1} parent=15 // pred_check_branch
          %575 = sbr.rel (%p573) target = $region60
        $region59: #{tpu_custom_call.1} parent=15 // pred_region
          %s576 = sand.u32 %s314, 1
          %s577 = scalar_lea.sflag [#allocation7], %s576
          %s578 = sand.u32 %s314, 1
          %s579 = smul.addr %s578, 256
          %s580 = scalar_lea.vmem [#allocation6], %s579
          %582 = vsyncadd %s577, 0
          %s583 = smul.addr %s40, 64
          %s584 = smul.addr %s583, 4
          %s585 = scalar_lea.hbm %s11, %s584
          %s586 = sshll.u32 %s585, 4
          %s587 = int_to_ptr.hbm [resolvable:$true] %s586
          %s588 = sshll.u32 %s580, 4
          %s589 = int_to_ptr.vmem [resolvable:$true] %s588
          %594 = dma.hbm_to_vmem [thread:$0]  %s587, 4096, %s589, %s577, 256, 256, 16
        $region60: #{tpu_custom_call.1} parent=15 // pred_fallthru
          _
        // Predicated region
        $region61: #{tpu_custom_call.1} parent=15 // pred_check
          %p595 = pneg %p350
        $region62: #{tpu_custom_call.1} parent=15 // pred_check_branch
          %597 = sbr.rel (%p595) target = $region64
        $region63: #{tpu_custom_call.1} parent=15 // pred_region
          %p598 = scmp.lt.s32.totalorder %s40, 1
          %s599 = scalar_select %p598, %s40, 1
          %s600 = smul.addr %s599, 4
          %s601 = scalar_lea.vmem %s12, %s600
        $region64: #{tpu_custom_call.1} parent=15 // pred_fallthru
          _
        // Predicated region
        $region65: #{tpu_custom_call.1} parent=15 // pred_check
          %p602 = pneg %p376
        $region66: #{tpu_custom_call.1} parent=15 // pred_check_branch
          %604 = sbr.rel (%p602) target = $region68
        $region67: #{tpu_custom_call.1} parent=15 // pred_region
          %s605 = sand.u32 %s366, 1
          %s606 = scalar_lea.sflag [#allocation10], %s605
          %s607 = sand.u32 %s366, 1
          %s608 = smul.addr %s607, 256
          %s609 = scalar_lea.vmem [#allocation9], %s608
          %611 = vsyncadd %s606, 0
          %s612 = smul.addr %s40, 64
          %s613 = smul.addr %s612, 4
          %s614 = scalar_lea.hbm %s13, %s613
          %s615 = sshll.u32 %s614, 4
          %s616 = int_to_ptr.hbm [resolvable:$true] %s615
          %s617 = sshll.u32 %s609, 4
          %s618 = int_to_ptr.vmem [resolvable:$true] %s617
          %623 = dma.hbm_to_vmem [thread:$0]  %s616, 4096, %s618, %s606, 64, 64, 4
        $region68: #{tpu_custom_call.1} parent=15 // pred_fallthru
          _
        // Predicated region
        $region69: #{tpu_custom_call.1} parent=15 // pred_check
          %p624 = pneg %p402
        $region70: #{tpu_custom_call.1} parent=15 // pred_check_branch
          %626 = sbr.rel (%p624) target = $region72
        $region71: #{tpu_custom_call.1} parent=15 // pred_region
          %p627 = scmp.lt.s32.totalorder %s40, 1
          %s628 = scalar_select %p627, %s40, 1
          %s629 = scalar_lea.vmem %s14, %s628
        $region72: #{tpu_custom_call.1} parent=15 // pred_fallthru
          _
        // Predicated region
        $region73: #{tpu_custom_call.1} parent=15 // pred_check
          %p630 = pneg %p428
        $region74: #{tpu_custom_call.1} parent=15 // pred_check_branch
          %632 = sbr.rel (%p630) target = $region76
        $region75: #{tpu_custom_call.1} parent=15 // pred_region
          %p633 = scmp.lt.s32.totalorder %s40, 1
          %s634 = scalar_select %p633, %s40, 1
          %s635 = scalar_lea.vmem %s15, %s634
        $region76: #{tpu_custom_call.1} parent=15 // pred_fallthru
          _
        // Predicated region
        $region77: #{tpu_custom_call.1} parent=15 // pred_check
          %p636 = pneg %p454
        $region78: #{tpu_custom_call.1} parent=15 // pred_check_branch
          %638 = sbr.rel (%p636) target = $region80
        $region79: #{tpu_custom_call.1} parent=15 // pred_region
          %p639 = scmp.lt.s32.totalorder %s40, 1
          %s640 = scalar_select %p639, %s40, 1
          %s641 = scalar_lea.vmem %s16, %s640
        $region80: #{tpu_custom_call.1} parent=15 // pred_fallthru
          _
      $region16: #{tpu_custom_call.1} parent=5 // pred_fallthru
        _
      %p642 = scmp.le.s32.totalorder 1, %s32
      %p643 = scmp.lt.s32.totalorder %s32, 3
      %p644 = pnand %p642, %p643
      %p645 = pneg %p644
      // Predicated region
      $region81: #{tpu_custom_call.1} parent=5 // pred_check
        _
      $region82: #{tpu_custom_call.1} parent=5 // pred_check_branch
        %647 = sbr.rel (%p644) target = $region84
      $region83: #{tpu_custom_call.1} parent=5 // pred_region
        %s648 = ssub.s32 %s32, 1
        %s649 = sand.u32 %s317, 1
        %s650 = scalar_lea.sflag [#allocation7], %s649
        %s651 = sand.u32 %s317, 1
        %s652 = smul.addr %s651, 256
        %s653 = scalar_lea.vmem [#allocation6], %s652
        // Predicated region
        $region85: #{tpu_custom_call.1} parent=83 // pred_check
          %p654 = pneg %p330
        $region86: #{tpu_custom_call.1} parent=83 // pred_check_branch
          %656 = sbr.rel (%p654) target = $region88
        $region87: #{tpu_custom_call.1} parent=83 // pred_region
          %658 = dma.done %s650, 4096
        $region88: #{tpu_custom_call.1} parent=83 // pred_fallthru
          _
        %s659 = sand.u32 %s369, 1
        %s660 = scalar_lea.sflag [#allocation10], %s659
        %s661 = sand.u32 %s369, 1
        %s662 = smul.addr %s661, 256
        %s663 = scalar_lea.vmem [#allocation9], %s662
        // Predicated region
        $region89: #{tpu_custom_call.1} parent=83 // pred_check
          %p664 = pneg %p382
        $region90: #{tpu_custom_call.1} parent=83 // pred_check_branch
          %666 = sbr.rel (%p664) target = $region92
        $region91: #{tpu_custom_call.1} parent=83 // pred_region
          %668 = dma.done %s660, 4096
        $region92: #{tpu_custom_call.1} parent=83 // pred_fallthru
          _
        %p669 = scmp.lt.s32.totalorder %s42, 1
        %s670 = scalar_select %p669, %s42, 1
        %s671 = smul.addr %s670, 16
        %s672 = smul.addr %s671, 4
        %s673 = scalar_lea.vmem %s1, %s672
        %p674 = pneg %p70
        %p675 = pneg %p67
        %p676 = scmp.lt.s32.totalorder %s42, 1
        %s677 = scalar_select %p676, %s42, 1
        %s678 = smul.addr %s677, 16
        %s679 = smul.addr %s678, 4
        %s680 = scalar_lea.vmem %s2, %s679
        %p681 = pneg %p96
        %p682 = pneg %p93
        %p683 = scmp.lt.s32.totalorder %s42, 1
        %s684 = scalar_select %p683, %s42, 1
        %s685 = smul.addr %s684, 16
        %s686 = smul.addr %s685, 4
        %s687 = scalar_lea.vmem %s3, %s686
        %p688 = pneg %p122
        %p689 = pneg %p119
        %p690 = scmp.lt.s32.totalorder %s42, 1
        %s691 = scalar_select %p690, %s42, 1
        %s692 = scalar_lea.vmem %s4, %s691
        %p693 = pneg %p148
        %p694 = pneg %p145
        %p695 = scmp.lt.s32.totalorder %s42, 1
        %s696 = scalar_select %p695, %s42, 1
        %s697 = scalar_lea.vmem %s5, %s696
        %p698 = pneg %p174
        %p699 = pneg %p171
        %p700 = scmp.lt.s32.totalorder %s42, 1
        %s701 = scalar_select %p700, %s42, 1
        %s702 = scalar_lea.vmem %s6, %s701
        %p703 = pneg %p200
        %p704 = pneg %p197
        %p705 = scmp.lt.s32.totalorder %s42, 1
        %s706 = scalar_select %p705, %s42, 1
        %s707 = smul.addr %s706, 4
        %s708 = smul.addr %s707, 4
        %s709 = scalar_lea.vmem %s7, %s708
        %p710 = pneg %p226
        %p711 = pneg %p223
        %p712 = scmp.lt.s32.totalorder %s42, 1
        %s713 = scalar_select %p712, %s42, 1
        %s714 = scalar_lea.vmem %s8, %s713
        %p715 = pneg %p252
        %p716 = pneg %p249
        %p717 = scmp.lt.s32.totalorder %s42, 1
        %s718 = scalar_select %p717, %s42, 1
        %s719 = scalar_lea.vmem %s9, %s718
        %p720 = pneg %p278
        %p721 = pneg %p275
        %p722 = scmp.lt.s32.totalorder %s42, 1
        %s723 = scalar_select %p722, %s42, 1
        %s724 = scalar_lea.vmem %s10, %s723
        %p725 = pneg %p304
        %p726 = pneg %p301
        %s727 = sand.u32 %s317, 1
        %s728 = scalar_lea.sflag [#allocation7], %s727
        %s729 = sand.u32 %s317, 1
        %s730 = smul.addr %s729, 256
        %s731 = scalar_lea.vmem [#allocation6], %s730
        %p732 = pneg %p330
        %p733 = pneg %p327
        %p734 = scmp.lt.s32.totalorder %s42, 1
        %s735 = scalar_select %p734, %s42, 1
        %s736 = smul.addr %s735, 4
        %s737 = scalar_lea.vmem %s12, %s736
        %p738 = pneg %p356
        %p739 = pneg %p353
        %s740 = sand.u32 %s369, 1
        %s741 = scalar_lea.sflag [#allocation10], %s740
        %s742 = sand.u32 %s369, 1
        %s743 = smul.addr %s742, 256
        %s744 = scalar_lea.vmem [#allocation9], %s743
        %p745 = pneg %p382
        %p746 = pneg %p379
        %p747 = scmp.lt.s32.totalorder %s42, 1
        %s748 = scalar_select %p747, %s42, 1
        %s749 = scalar_lea.vmem %s14, %s748
        %p750 = pneg %p408
        %p751 = pneg %p405
        %p752 = scmp.lt.s32.totalorder %s42, 1
        %s753 = scalar_select %p752, %s42, 1
        %s754 = scalar_lea.vmem %s15, %s753
        %p755 = pneg %p434
        %p756 = pneg %p431
        %p757 = scmp.lt.s32.totalorder %s42, 1
        %s758 = scalar_select %p757, %s42, 1
        %s759 = scalar_lea.vmem %s16, %s758
        %p760 = pneg %p460
        %p761 = pneg %p457
        %p762 = pneg %p486
        %p763 = pneg %p483
        %p764 = scmp.lt.s32.totalorder %s42, 1
        %s765 = scalar_select %p764, %s42, 1
        %s766 = smul.addr %s765, 16
        %s767 = smul.addr %s766, 4
        %s768 = scalar_lea.vmem %s1, %s767
        %p769 = scmp.lt.s32.totalorder %s42, 1
        %s770 = scalar_select %p769, %s42, 1
        %s771 = smul.addr %s770, 16
        %s772 = smul.addr %s771, 4
        %s773 = scalar_lea.vmem %s2, %s772
        %p774 = scmp.lt.s32.totalorder %s42, 1
        %s775 = scalar_select %p774, %s42, 1
        %s776 = smul.addr %s775, 16
        %s777 = smul.addr %s776, 4
        %s778 = scalar_lea.vmem %s3, %s777
        %p779 = scmp.lt.s32.totalorder %s42, 1
        %s780 = scalar_select %p779, %s42, 1
        %s781 = scalar_lea.vmem %s4, %s780
        %p782 = scmp.lt.s32.totalorder %s42, 1
        %s783 = scalar_select %p782, %s42, 1
        %s784 = scalar_lea.vmem %s5, %s783
        %p785 = scmp.lt.s32.totalorder %s42, 1
        %s786 = scalar_select %p785, %s42, 1
        %s787 = scalar_lea.vmem %s6, %s786
        %p788 = scmp.lt.s32.totalorder %s42, 1
        %s789 = scalar_select %p788, %s42, 1
        %s790 = smul.addr %s789, 4
        %s791 = smul.addr %s790, 4
        %s792 = scalar_lea.vmem %s7, %s791
        %p793 = scmp.lt.s32.totalorder %s42, 1
        %s794 = scalar_select %p793, %s42, 1
        %s795 = scalar_lea.vmem %s8, %s794
        %p796 = scmp.lt.s32.totalorder %s42, 1
        %s797 = scalar_select %p796, %s42, 1
        %s798 = scalar_lea.vmem %s9, %s797
        %p799 = scmp.lt.s32.totalorder %s42, 1
        %s800 = scalar_select %p799, %s42, 1
        %s801 = scalar_lea.vmem %s10, %s800
        %p802 = scmp.lt.s32.totalorder %s42, 1
        %s803 = scalar_select %p802, %s42, 1
        %s804 = smul.addr %s803, 4
        %s805 = scalar_lea.vmem %s12, %s804
        %p806 = scmp.lt.s32.totalorder %s42, 1
        %s807 = scalar_select %p806, %s42, 1
        %s808 = scalar_lea.vmem %s14, %s807
        %p809 = scmp.lt.s32.totalorder %s42, 1
        %s810 = scalar_select %p809, %s42, 1
        %s811 = scalar_lea.vmem %s15, %s810
        %p812 = scmp.lt.s32.totalorder %s42, 1
        %s813 = scalar_select %p812, %s42, 1
        %s814 = scalar_lea.vmem %s16, %s813
        %p816 = scmp.eq.s32.totalorder %s42, 0
        // Predicated region
        $region93: #{tpu_custom_call.1} parent=83 // pred_check
          %p817 = pneg %p816
        $region94: #{tpu_custom_call.1} parent=83 // pred_check_branch
          %819 = sbr.rel (%p817) target = $region96
        $region95: #{tpu_custom_call.1} parent=83 // pred_region
          // Predicated region
          $region97: #{tpu_custom_call.1} parent=95 // pred_check
            _
          $region98: #{tpu_custom_call.1} parent=95 // pred_check_branch
            %821 = sbr.rel (0) target = $region100
          $region99: #{tpu_custom_call.1} parent=95 // pred_region
            loop: start=0, step=1, limit=1
            $region101: #{tpu_custom_call.1} parent=99 // loop_pre_header
              _
            $region102: #{tpu_custom_call.1} parent=99 // loop_header
              %s823 = sphi 0, %s827
              %p824 = scmp.ge.s32.totalorder %s823, 1
              %s828 = sphi %s0, %s0
              %s829 = sphi [#allocation2], [#allocation2]
            $region103: #{tpu_custom_call.1} parent=99 // loop_header_branch
              %826 = sbr.rel (%p824) target = $region107
            $region104: #{tpu_custom_call.1} parent=99 // loop_body
              %v830 = vld [vmem:[%s828] sm:$0xff]
              %831 = vst [vmem:[%s829] sm:$0xff] %v830
              %v832 = vld [vmem:[%s828 + $0x8] sm:$0xff]
              %833 = vst [vmem:[%s829 + $0x8] sm:$0xff] %v832
              %v834 = vld [vmem:[%s828 + $0x10] sm:$0xff]
              %835 = vst [vmem:[%s829 + $0x10] sm:$0xff] %v834
              %v836 = vld [vmem:[%s828 + $0x18] sm:$0xff]
              %837 = vst [vmem:[%s829 + $0x18] sm:$0xff] %v836
            $region105: #{tpu_custom_call.1} parent=99 // loop_footer
              %s827 = sadd.s32 1, %s823
            $region106: #{tpu_custom_call.1} parent=99 // loop_footer_branch
              %822 = sbr.rel target = $region102
            $region107: #{tpu_custom_call.1} parent=99 // loop_exit
              _
          $region100: #{tpu_custom_call.1} parent=95 // pred_fallthru
            _
          // Predicated region
          $region108: #{tpu_custom_call.1} parent=95 // pred_check
            _
          $region109: #{tpu_custom_call.1} parent=95 // pred_check_branch
            %839 = sbr.rel target = $region111
          $region110: #{tpu_custom_call.1} parent=95 // pred_region
            _
          $region111: #{tpu_custom_call.1} parent=95 // pred_fallthru
            _
          // Predicated region
          $region112: #{tpu_custom_call.1} parent=95 // pred_check
            _
          $region113: #{tpu_custom_call.1} parent=95 // pred_check_branch
            %842 = sbr.rel (0) target = $region115
          $region114: #{tpu_custom_call.1} parent=95 // pred_region
            %843 = vsyncadd [#allocation5], 512
          $region115: #{tpu_custom_call.1} parent=95 // pred_fallthru
            _
          %s844 = smul.u32 2, 16
          %s845 = smul.u32 %s844, 1
          %s846 = sshll.u32 %s845, 4
          %847 = dma.done [#allocation5], %s846
        $region96: #{tpu_custom_call.1} parent=83 // pred_fallthru
          _
        %v848 = vld [vmem:[#allocation2] sm:$0xff]
        %v849 = vld [vmem:[#allocation2 + $0x8] sm:$0xff]
        %v850 = vld [vmem:[#allocation2 + $0x10] sm:$0xff]
        %v851 = vld [vmem:[#allocation2 + $0x18] sm:$0xff]
        %v852 = vpack.c.bf16 %v849, %v848
        %v853 = vpack.c.bf16 %v851, %v850
        %v854 = vld [vmem:[%s768] sm:$0xf]
        %v855 = vld [vmem:[%s768 + $0x4] sm:$0xf]
        %v856 = vld [vmem:[%s768 + $0x8] sm:$0xf]
        %v857 = vld [vmem:[%s768 + $0xc] sm:$0xf]
        %v858 = vld [vmem:[%s768 + $0x10] sm:$0xf]
        %v859 = vld [vmem:[%s768 + $0x14] sm:$0xf]
        %v860 = vld [vmem:[%s768 + $0x18] sm:$0xf]
        %v861 = vld [vmem:[%s768 + $0x1c] sm:$0xf]
        %v862 = vld [vmem:[%s768 + $0x20] sm:$0xf]
        %v863 = vld [vmem:[%s768 + $0x24] sm:$0xf]
        %v864 = vld [vmem:[%s768 + $0x28] sm:$0xf]
        %v865 = vld [vmem:[%s768 + $0x2c] sm:$0xf]
        %v866 = vld [vmem:[%s768 + $0x30] sm:$0xf]
        %v867 = vld [vmem:[%s768 + $0x34] sm:$0xf]
        %v868 = vld [vmem:[%s768 + $0x38] sm:$0xf]
        %v869 = vld [vmem:[%s768 + $0x3c] sm:$0xf]
        %v870 = vld [vmem:[%s781] sm:$0x1]
        %v872 = vperm.slane %v870, 0
        %v890 = vunpack.c.l.b16 %v854
        %v891 = vunpack.c.l.b16 %v855
        %v892 = vunpack.c.l.b16 %v856
        %v893 = vunpack.c.l.b16 %v857
        %v894 = vunpack.c.l.b16 %v858
        %v895 = vunpack.c.l.b16 %v859
        %v896 = vunpack.c.l.b16 %v860
        %v897 = vunpack.c.l.b16 %v861
        %v898 = vunpack.c.l.b16 %v862
        %v899 = vunpack.c.l.b16 %v863
        %v900 = vunpack.c.l.b16 %v864
        %v901 = vunpack.c.l.b16 %v865
        %v902 = vunpack.c.l.b16 %v866
        %v903 = vunpack.c.l.b16 %v867
        %v904 = vunpack.c.l.b16 %v868
        %v905 = vunpack.c.l.b16 %v869
        %v906 = vpack.c.b16 %v891, %v890
        %v907 = vpack.c.b16 %v893, %v892
        %v908 = vpack.c.b16 %v895, %v894
        %v909 = vpack.c.b16 %v897, %v896
        %v910 = vpack.c.b16 %v899, %v898
        %v911 = vpack.c.b16 %v901, %v900
        %v912 = vpack.c.b16 %v903, %v902
        %v913 = vpack.c.b16 %v905, %v904
        %922 = vmatpush.bf16.msra.mxu0 %v913
        %923 = vmatpush.bf16.msra.mxu0 %v912
        %924 = vmatpush.bf16.msra.mxu0 %v911
        %925 = vmatpush.bf16.msra.mxu0 %v910
        %926 = vmatpush.bf16.msra.mxu0 %v909
        %927 = vmatpush.bf16.msra.mxu0 %v908
        %928 = vmatpush.bf16.msra.mxu0 %v907
        %929 = vmatpush.bf16.msra.mxu0 %v906
        %930 = vmatmul.bf16.gmra.mxu0 %v852
        %v931 = vpop.f32.mrf.mxu0
        %v932 = vadd.f32 %v872, %v931
        %v933 = vpop.f32.mrf.mxu0
        %v934 = vadd.f32 %v872, %v933
        %935 = vmatmul.bf16.gmra.mxu0 %v853
        %v936 = vpop.f32.mrf.mxu0
        %v937 = vadd.f32 %v872, %v936
        %v938 = vpop.f32.mrf.mxu0
        %v939 = vadd.f32 %v872, %v938
        %940 = vdwg.mxu0
        %v941 = vld [vmem:[%s773] sm:$0xf]
        %v942 = vld [vmem:[%s773 + $0x4] sm:$0xf]
        %v943 = vld [vmem:[%s773 + $0x8] sm:$0xf]
        %v944 = vld [vmem:[%s773 + $0xc] sm:$0xf]
        %v945 = vld [vmem:[%s773 + $0x10] sm:$0xf]
        %v946 = vld [vmem:[%s773 + $0x14] sm:$0xf]
        %v947 = vld [vmem:[%s773 + $0x18] sm:$0xf]
        %v948 = vld [vmem:[%s773 + $0x1c] sm:$0xf]
        %v949 = vld [vmem:[%s773 + $0x20] sm:$0xf]
        %v950 = vld [vmem:[%s773 + $0x24] sm:$0xf]
        %v951 = vld [vmem:[%s773 + $0x28] sm:$0xf]
        %v952 = vld [vmem:[%s773 + $0x2c] sm:$0xf]
        %v953 = vld [vmem:[%s773 + $0x30] sm:$0xf]
        %v954 = vld [vmem:[%s773 + $0x34] sm:$0xf]
        %v955 = vld [vmem:[%s773 + $0x38] sm:$0xf]
        %v956 = vld [vmem:[%s773 + $0x3c] sm:$0xf]
        %v957 = vld [vmem:[%s784] sm:$0x1]
        %v959 = vperm.slane %v957, 0
        %v977 = vunpack.c.l.b16 %v941
        %v978 = vunpack.c.l.b16 %v942
        %v979 = vunpack.c.l.b16 %v943
        %v980 = vunpack.c.l.b16 %v944
        %v981 = vunpack.c.l.b16 %v945
        %v982 = vunpack.c.l.b16 %v946
        %v983 = vunpack.c.l.b16 %v947
        %v984 = vunpack.c.l.b16 %v948
        %v985 = vunpack.c.l.b16 %v949
        %v986 = vunpack.c.l.b16 %v950
        %v987 = vunpack.c.l.b16 %v951
        %v988 = vunpack.c.l.b16 %v952
        %v989 = vunpack.c.l.b16 %v953
        %v990 = vunpack.c.l.b16 %v954
        %v991 = vunpack.c.l.b16 %v955
        %v992 = vunpack.c.l.b16 %v956
        %v993 = vpack.c.b16 %v978, %v977
        %v994 = vpack.c.b16 %v980, %v979
        %v995 = vpack.c.b16 %v982, %v981
        %v996 = vpack.c.b16 %v984, %v983
        %v997 = vpack.c.b16 %v986, %v985
        %v998 = vpack.c.b16 %v988, %v987
        %v999 = vpack.c.b16 %v990, %v989
        %v1000 = vpack.c.b16 %v992, %v991
        %1009 = vmatpush.bf16.msra.mxu0 %v1000
        %1010 = vmatpush.bf16.msra.mxu0 %v999
        %1011 = vmatpush.bf16.msra.mxu0 %v998
        %1012 = vmatpush.bf16.msra.mxu0 %v997
        %1013 = vmatpush.bf16.msra.mxu0 %v996
        %1014 = vmatpush.bf16.msra.mxu0 %v995
        %1015 = vmatpush.bf16.msra.mxu0 %v994
        %1016 = vmatpush.bf16.msra.mxu0 %v993
        %1017 = vmatmul.bf16.gmra.mxu0 %v852
        %v1018 = vpop.f32.mrf.mxu0
        %v1019 = vadd.f32 %v959, %v1018
        %v1020 = vpop.f32.mrf.mxu0
        %v1021 = vadd.f32 %v959, %v1020
        %1022 = vmatmul.bf16.gmra.mxu0 %v853
        %v1023 = vpop.f32.mrf.mxu0
        %v1024 = vadd.f32 %v959, %v1023
        %v1025 = vpop.f32.mrf.mxu0
        %v1026 = vadd.f32 %v959, %v1025
        %1027 = vdwg.mxu0
        %v1028 = vld [vmem:[%s778] sm:$0xf]
        %v1029 = vld [vmem:[%s778 + $0x4] sm:$0xf]
        %v1030 = vld [vmem:[%s778 + $0x8] sm:$0xf]
        %v1031 = vld [vmem:[%s778 + $0xc] sm:$0xf]
        %v1032 = vld [vmem:[%s778 + $0x10] sm:$0xf]
        %v1033 = vld [vmem:[%s778 + $0x14] sm:$0xf]
        %v1034 = vld [vmem:[%s778 + $0x18] sm:$0xf]
        %v1035 = vld [vmem:[%s778 + $0x1c] sm:$0xf]
        %v1036 = vld [vmem:[%s778 + $0x20] sm:$0xf]
        %v1037 = vld [vmem:[%s778 + $0x24] sm:$0xf]
        %v1038 = vld [vmem:[%s778 + $0x28] sm:$0xf]
        %v1039 = vld [vmem:[%s778 + $0x2c] sm:$0xf]
        %v1040 = vld [vmem:[%s778 + $0x30] sm:$0xf]
        %v1041 = vld [vmem:[%s778 + $0x34] sm:$0xf]
        %v1042 = vld [vmem:[%s778 + $0x38] sm:$0xf]
        %v1043 = vld [vmem:[%s778 + $0x3c] sm:$0xf]
        %v1044 = vld [vmem:[%s787] sm:$0x1]
        %v1046 = vperm.slane %v1044, 0
        %v1064 = vunpack.c.l.b16 %v1028
        %v1065 = vunpack.c.l.b16 %v1029
        %v1066 = vunpack.c.l.b16 %v1030
        %v1067 = vunpack.c.l.b16 %v1031
        %v1068 = vunpack.c.l.b16 %v1032
        %v1069 = vunpack.c.l.b16 %v1033
        %v1070 = vunpack.c.l.b16 %v1034
        %v1071 = vunpack.c.l.b16 %v1035
        %v1072 = vunpack.c.l.b16 %v1036
        %v1073 = vunpack.c.l.b16 %v1037
        %v1074 = vunpack.c.l.b16 %v1038
        %v1075 = vunpack.c.l.b16 %v1039
        %v1076 = vunpack.c.l.b16 %v1040
        %v1077 = vunpack.c.l.b16 %v1041
        %v1078 = vunpack.c.l.b16 %v1042
        %v1079 = vunpack.c.l.b16 %v1043
        %v1080 = vpack.c.b16 %v1065, %v1064
        %v1081 = vpack.c.b16 %v1067, %v1066
        %v1082 = vpack.c.b16 %v1069, %v1068
        %v1083 = vpack.c.b16 %v1071, %v1070
        %v1084 = vpack.c.b16 %v1073, %v1072
        %v1085 = vpack.c.b16 %v1075, %v1074
        %v1086 = vpack.c.b16 %v1077, %v1076
        %v1087 = vpack.c.b16 %v1079, %v1078
        %1096 = vmatpush.bf16.msra.mxu0 %v1087
        %1097 = vmatpush.bf16.msra.mxu0 %v1086
        %1098 = vmatpush.bf16.msra.mxu0 %v1085
        %1099 = vmatpush.bf16.msra.mxu0 %v1084
        %1100 = vmatpush.bf16.msra.mxu0 %v1083
        %1101 = vmatpush.bf16.msra.mxu0 %v1082
        %1102 = vmatpush.bf16.msra.mxu0 %v1081
        %1103 = vmatpush.bf16.msra.mxu0 %v1080
        %1104 = vmatmul.bf16.gmra.mxu0 %v852
        %v1105 = vpop.f32.mrf.mxu0
        %v1106 = vadd.f32 %v1046, %v1105
        %v1107 = vpop.f32.mrf.mxu0
        %v1108 = vadd.f32 %v1046, %v1107
        %1109 = vmatmul.bf16.gmra.mxu0 %v853
        %v1110 = vpop.f32.mrf.mxu0
        %v1111 = vadd.f32 %v1046, %v1110
        %v1112 = vpop.f32.mrf.mxu0
        %v1113 = vadd.f32 %v1046, %v1112
        %1114 = vdwg.mxu0
        %v1115 = vmul.f32 %v932, 0.17677669
        %v1116 = vmul.f32 %v934, 0.17677669
        %v1117 = vmul.f32 %v937, 0.17677669
        %v1118 = vmul.f32 %v939, 0.17677669
        %v1119 = vpack.c.bf16 %v1115, %v1115
        %v1120 = vpack.c.bf16 %v1116, %v1116
        %v1121 = vpack.c.bf16 %v1117, %v1117
        %v1122 = vpack.c.bf16 %v1118, %v1118
        %v1123 = vpack.c.bf16 %v1019, %v1019
        %v1124 = vpack.c.bf16 %v1021, %v1021
        %v1125 = vpack.c.bf16 %v1024, %v1024
        %v1126 = vpack.c.bf16 %v1026, %v1026
        %v1127 = vpack.c.bf16 %v1106, %v1106
        %v1128 = vpack.c.bf16 %v1108, %v1108
        %v1129 = vpack.c.bf16 %v1111, %v1111
        %v1130 = vpack.c.bf16 %v1113, %v1113
        %v1133 = vunpack.c.l.b16 %v1119
        %v1134 = vunpack.c.l.b16 %v1120
        %v1135 = vpack.c.b16 %v1134, %v1133
        %v1138 = vunpack.c.l.b16 %v1123
        %v1139 = vunpack.c.l.b16 %v1124
        %v1140 = vpack.c.b16 %v1139, %v1138
        %vm1141 = vcmask 261120
        %v1143 = vsel %vm1141, %v1135, 0
        %v1146 = vsel %vm1141, %v1140, 0
        %1148 = vmatpush.bf16.xpose.msra.mxu0 0
        %1149 = vmatpush.bf16.xpose.msra.mxu0 0
        %1150 = vmatpush.bf16.xpose.msra.mxu0 0
        %1151 = vmatpush.bf16.xpose.msra.mxu0 0
        %1152 = vmatpush.bf16.xpose.msra.mxu0 0
        %1153 = vmatpush.bf16.xpose.msra.mxu0 0
        %1154 = vmatpush.bf16.xpose.msra.mxu0 0
        %1155 = vmatpush.bf16.xpose.msra.mxu0 %v1146
        %1156 = vmatmul.bf16.gmra.mxu0 %v1143
        %v1157 = vpop.f32.mrf.mxu0
        %v1158 = vadd.f32 0.0, %v1157
        %v1159 = vpop.f32.mrf.mxu0
        %v1160 = vadd.f32 0.0, %v1159
        %1161 = vdwg.mxu0
        %v1164 = vunpack.c.l.b16 %v1121
        %v1165 = vunpack.c.l.b16 %v1122
        %v1166 = vpack.c.b16 %v1165, %v1164
        %v1169 = vunpack.c.l.b16 %v1125
        %v1170 = vunpack.c.l.b16 %v1126
        %v1171 = vpack.c.b16 %v1170, %v1169
        %v1173 = vsel %vm1141, %v1166, 0
        %v1176 = vsel %vm1141, %v1171, 0
        %1178 = vmatpush.bf16.xpose.msra.mxu0 0
        %1179 = vmatpush.bf16.xpose.msra.mxu0 0
        %1180 = vmatpush.bf16.xpose.msra.mxu0 0
        %1181 = vmatpush.bf16.xpose.msra.mxu0 0
        %1182 = vmatpush.bf16.xpose.msra.mxu0 0
        %1183 = vmatpush.bf16.xpose.msra.mxu0 0
        %1184 = vmatpush.bf16.xpose.msra.mxu0 0
        %1185 = vmatpush.bf16.xpose.msra.mxu0 %v1176
        %1186 = vmatmul.bf16.gmra.mxu0 %v1173
        %v1187 = vpop.f32.mrf.mxu0
        %v1188 = vadd.f32 0.0, %v1187
        %v1189 = vpop.f32.mrf.mxu0
        %v1190 = vadd.f32 0.0, %v1189
        %1191 = vdwg.mxu0
        %vm1192 = vcmask 130048
        %v1193 = vsel %vm1192, %v1158, -inf
        %1194 = vmax.xlane.f32.xlu0 %v1193
        %v1195 = vpop.xlane.xlu0 %1194
        %v1196 = vsel %vm1192, %v1160, -inf
        %1197 = vmax.xlane.f32.xlu0 %v1196
        %v1198 = vpop.xlane.xlu0 %1197
        %v1199 = vsel %vm1192, %v1188, -inf
        %1200 = vmax.xlane.f32.xlu0 %v1199
        %v1201 = vpop.xlane.xlu0 %1200
        %v1202 = vsel %vm1192, %v1190, -inf
        %1203 = vmax.xlane.f32.xlu0 %v1202
        %v1204 = vpop.xlane.xlu0 %1203
        %v1205 = vsub.f32 %v1158, %v1195
        %v1206 = vsub.f32 %v1160, %v1198
        %v1207 = vsub.f32 %v1188, %v1201
        %v1208 = vsub.f32 %v1190, %v1204
        %v1209 = vmul.f32 %v1205, 1.442695
        %v1210 = vpow.pop %v1209
        %v1211 = vmul.f32 %v1206, 1.442695
        %v1212 = vpow.pop %v1211
        %v1213 = vmul.f32 %v1207, 1.442695
        %v1214 = vpow.pop %v1213
        %v1215 = vmul.f32 %v1208, 1.442695
        %v1216 = vpow.pop %v1215
        %v1217 = vsel %vm1192, %v1210, 0.0
        %1218 = vadd.xlane.f32.xlu0 %v1217
        %v1219 = vpop.xlane.xlu0 %1218
        %v1220 = vsel %vm1192, %v1212, 0.0
        %1221 = vadd.xlane.f32.xlu0 %v1220
        %v1222 = vpop.xlane.xlu0 %1221
        %v1223 = vsel %vm1192, %v1214, 0.0
        %1224 = vadd.xlane.f32.xlu0 %v1223
        %v1225 = vpop.xlane.xlu0 %1224
        %v1226 = vsel %vm1192, %v1216, 0.0
        %1227 = vadd.xlane.f32.xlu0 %v1226
        %v1228 = vpop.xlane.xlu0 %1227
        %v1229 = vrcp.pop %v1219
        %v1230 = vrcp.pop %v1222
        %v1231 = vrcp.pop %v1225
        %v1232 = vrcp.pop %v1228
        %v1233 = vmul.f32 %v1210, %v1229
        %v1234 = vmul.f32 %v1212, %v1230
        %v1235 = vmul.f32 %v1214, %v1231
        %v1236 = vmul.f32 %v1216, %v1232
        %v1237 = vpack.c.bf16 %v1233, %v1233
        %v1238 = vpack.c.bf16 %v1234, %v1234
        %v1239 = vpack.c.bf16 %v1235, %v1235
        %v1240 = vpack.c.bf16 %v1236, %v1236
        %v1243 = vunpack.c.l.b16 %v1237
        %v1244 = vunpack.c.l.b16 %v1238
        %v1245 = vpack.c.b16 %v1244, %v1243
        %v1248 = vunpack.c.l.b16 %v1127
        %v1249 = vunpack.c.l.b16 %v1128
        %v1250 = vpack.c.b16 %v1249, %v1248
        %v1253 = vsel %vm1192, %v1245, 0
        %1255 = vmatpush.bf16.msra.mxu0 0
        %1256 = vmatpush.bf16.msra.mxu0 0
        %1257 = vmatpush.bf16.msra.mxu0 0
        %1258 = vmatpush.bf16.msra.mxu0 0
        %1259 = vmatpush.bf16.msra.mxu0 0
        %1260 = vmatpush.bf16.msra.mxu0 0
        %1261 = vmatpush.bf16.msra.mxu0 0
        %1262 = vmatpush.bf16.msra.mxu0 %v1250
        %1263 = vmatmul.bf16.gmra.mxu0 %v1253
        %v1264 = vpop.f32.mrf.mxu0
        %v1265 = vadd.f32 0.0, %v1264
        %v1266 = vpop.f32.mrf.mxu0
        %v1267 = vadd.f32 0.0, %v1266
        %1268 = vdwg.mxu0
        %v1271 = vunpack.c.l.b16 %v1239
        %v1272 = vunpack.c.l.b16 %v1240
        %v1273 = vpack.c.b16 %v1272, %v1271
        %v1276 = vunpack.c.l.b16 %v1129
        %v1277 = vunpack.c.l.b16 %v1130
        %v1278 = vpack.c.b16 %v1277, %v1276
        %v1281 = vsel %vm1192, %v1273, 0
        %1283 = vmatpush.bf16.msra.mxu0 0
        %1284 = vmatpush.bf16.msra.mxu0 0
        %1285 = vmatpush.bf16.msra.mxu0 0
        %1286 = vmatpush.bf16.msra.mxu0 0
        %1287 = vmatpush.bf16.msra.mxu0 0
        %1288 = vmatpush.bf16.msra.mxu0 0
        %1289 = vmatpush.bf16.msra.mxu0 0
        %1290 = vmatpush.bf16.msra.mxu0 %v1278
        %1291 = vmatmul.bf16.gmra.mxu0 %v1281
        %v1292 = vpop.f32.mrf.mxu0
        %v1293 = vadd.f32 0.0, %v1292
        %v1294 = vpop.f32.mrf.mxu0
        %v1295 = vadd.f32 0.0, %v1294
        %1296 = vdwg.mxu0
        %v1297 = vpack.c.bf16 %v1267, %v1265
        %v1298 = vpack.c.bf16 %v1295, %v1293
        %v1299 = vld [vmem:[%s792] sm:$0xf]
        %v1300 = vld [vmem:[%s792 + $0x4] sm:$0xf]
        %v1301 = vld [vmem:[%s792 + $0x8] sm:$0xf]
        %v1302 = vld [vmem:[%s792 + $0xc] sm:$0xf]
        %v1303 = vld [vmem:[%s795] sm:$0x1]
        %v1305 = vperm.slane %v1303, 0
        %v1311 = vunpack.c.l.b16 %v1299
        %v1312 = vunpack.c.l.b16 %v1300
        %v1313 = vunpack.c.l.b16 %v1301
        %v1314 = vunpack.c.l.b16 %v1302
        %v1315 = vpack.c.b16 %v1312, %v1311
        %v1316 = vpack.c.b16 %v1314, %v1313
        %v1320 = vsel %vm1141, %v1297, 0
        %v1323 = vsel %vm1141, %v1298, 0
        %1325 = vmatpush.bf16.msra.mxu0 0
        %1326 = vmatpush.bf16.msra.mxu0 0
        %1327 = vmatpush.bf16.msra.mxu0 0
        %1328 = vmatpush.bf16.msra.mxu0 0
        %1329 = vmatpush.bf16.msra.mxu0 0
        %1330 = vmatpush.bf16.msra.mxu0 0
        %1331 = vmatpush.bf16.msra.mxu0 %v1316
        %1332 = vmatpush.bf16.msra.mxu0 %v1315
        %1333 = vmatmul.bf16.gmra.mxu0 %v1320
        %v1334 = vpop.f32.mrf.mxu0
        %v1335 = vadd.f32 %v1305, %v1334
        %v1336 = vpop.f32.mrf.mxu0
        %v1337 = vadd.f32 %v1305, %v1336
        %1338 = vmatmul.bf16.gmra.mxu0 %v1323
        %v1339 = vpop.f32.mrf.mxu0
        %v1340 = vadd.f32 %v1305, %v1339
        %v1341 = vpop.f32.mrf.mxu0
        %v1342 = vadd.f32 %v1305, %v1341
        %1343 = vdwg.mxu0
        %v1344 = vadd.f32 %v848, %v1335
        %v1345 = vadd.f32 %v849, %v1337
        %v1346 = vadd.f32 %v850, %v1340
        %v1347 = vadd.f32 %v851, %v1342
        %v1348 = vld [vmem:[%s798] sm:$0x1]
        %v1349 = vld [vmem:[%s801] sm:$0x1]
        %1350 = vadd.xlane.f32.xlu0 %v1344
        %v1351 = vpop.xlane.xlu0 %1350
        %1352 = vadd.xlane.f32.xlu0 %v1345
        %v1353 = vpop.xlane.xlu0 %1352
        %1354 = vadd.xlane.f32.xlu0 %v1346
        %v1355 = vpop.xlane.xlu0 %1354
        %1356 = vadd.xlane.f32.xlu0 %v1347
        %v1357 = vpop.xlane.xlu0 %1356
        %v1358 = vrcp.pop 128.0
        %v1359 = vmul.f32 128.0, %v1358
        %v1360 = vsub.f32 1.0, %v1359
        %v1361 = vmul.f32 %v1358, %v1360
        %v1362 = vadd.f32 %v1358, %v1361
        %vm1363 = vweird.f32 %v1358
        %v1364 = vsel %vm1363, %v1358, %v1362
        %v1365 = vmul.f32 %v1351, %v1364
        %v1366 = vmul.f32 %v1353, %v1364
        %v1367 = vmul.f32 %v1355, %v1364
        %v1368 = vmul.f32 %v1357, %v1364
        %v1369 = vmul.f32 %v1344, %v1344
        %v1370 = vmul.f32 %v1345, %v1345
        %v1371 = vmul.f32 %v1346, %v1346
        %v1372 = vmul.f32 %v1347, %v1347
        %1373 = vadd.xlane.f32.xlu0 %v1369
        %v1374 = vpop.xlane.xlu0 %1373
        %1375 = vadd.xlane.f32.xlu0 %v1370
        %v1376 = vpop.xlane.xlu0 %1375
        %1377 = vadd.xlane.f32.xlu0 %v1371
        %v1378 = vpop.xlane.xlu0 %1377
        %1379 = vadd.xlane.f32.xlu0 %v1372
        %v1380 = vpop.xlane.xlu0 %1379
        %v1381 = vmul.f32 %v1374, %v1364
        %v1382 = vmul.f32 %v1376, %v1364
        %v1383 = vmul.f32 %v1378, %v1364
        %v1384 = vmul.f32 %v1380, %v1364
        %v1385 = vmul.f32 %v1365, %v1365
        %v1386 = vmul.f32 %v1366, %v1366
        %v1387 = vmul.f32 %v1367, %v1367
        %v1388 = vmul.f32 %v1368, %v1368
        %v1389 = vsub.f32 %v1381, %v1385
        %v1390 = vsub.f32 %v1382, %v1386
        %v1391 = vsub.f32 %v1383, %v1387
        %v1392 = vsub.f32 %v1384, %v1388
        %v1393 = vsub.f32 %v1344, %v1365
        %v1394 = vsub.f32 %v1345, %v1366
        %v1395 = vsub.f32 %v1346, %v1367
        %v1396 = vsub.f32 %v1347, %v1368
        %v1397 = vadd.f32 %v1389, 1e-05
        %v1398 = vadd.f32 %v1390, 1e-05
        %v1399 = vadd.f32 %v1391, 1e-05
        %v1400 = vadd.f32 %v1392, 1e-05
        %v1401 = vrsqrt.pop %v1397
        %v1402 = vmul.f32 %v1401, %v1397
        %v1403 = vmul.f32 %v1402, %v1401
        %v1404 = vmul.f32 0.5, %v1403
        %v1405 = vsub.f32 1.5, %v1404
        %v1406 = vmul.f32 %v1401, %v1405
        %vm1407 = vweird.f32 %v1397
        %vm1408 = vweird.f32 %v1401
        %vm1409 = vmor %vm1407, %vm1408
        %v1410 = vsel %vm1409, %v1401, %v1406
        %v1411 = vrsqrt.pop %v1398
        %v1412 = vmul.f32 %v1411, %v1398
        %v1413 = vmul.f32 %v1412, %v1411
        %v1414 = vmul.f32 0.5, %v1413
        %v1415 = vsub.f32 1.5, %v1414
        %v1416 = vmul.f32 %v1411, %v1415
        %vm1417 = vweird.f32 %v1398
        %vm1418 = vweird.f32 %v1411
        %vm1419 = vmor %vm1417, %vm1418
        %v1420 = vsel %vm1419, %v1411, %v1416
        %v1421 = vrsqrt.pop %v1399
        %v1422 = vmul.f32 %v1421, %v1399
        %v1423 = vmul.f32 %v1422, %v1421
        %v1424 = vmul.f32 0.5, %v1423
        %v1425 = vsub.f32 1.5, %v1424
        %v1426 = vmul.f32 %v1421, %v1425
        %vm1427 = vweird.f32 %v1399
        %vm1428 = vweird.f32 %v1421
        %vm1429 = vmor %vm1427, %vm1428
        %v1430 = vsel %vm1429, %v1421, %v1426
        %v1431 = vrsqrt.pop %v1400
        %v1432 = vmul.f32 %v1431, %v1400
        %v1433 = vmul.f32 %v1432, %v1431
        %v1434 = vmul.f32 0.5, %v1433
        %v1435 = vsub.f32 1.5, %v1434
        %v1436 = vmul.f32 %v1431, %v1435
        %vm1437 = vweird.f32 %v1400
        %vm1438 = vweird.f32 %v1431
        %vm1439 = vmor %vm1437, %vm1438
        %v1440 = vsel %vm1439, %v1431, %v1436
        %v1441 = vmul.f32 %v1393, %v1410
        %v1442 = vmul.f32 %v1394, %v1420
        %v1443 = vmul.f32 %v1395, %v1430
        %v1444 = vmul.f32 %v1396, %v1440
        %v1446 = vperm.slane %v1348, 0
        %v1448 = vmul.f32 %v1441, %v1446
        %v1449 = vmul.f32 %v1442, %v1446
        %v1450 = vmul.f32 %v1443, %v1446
        %v1451 = vmul.f32 %v1444, %v1446
        %v1453 = vperm.slane %v1349, 0
        %v1455 = vadd.f32 %v1448, %v1453
        %v1456 = vadd.f32 %v1449, %v1453
        %v1457 = vadd.f32 %v1450, %v1453
        %v1458 = vadd.f32 %v1451, %v1453
        %v1459 = vpack.c.bf16 %v1456, %v1455
        %v1460 = vpack.c.bf16 %v1458, %v1457
        %v1461 = vld [vmem:[%s653] sm:$0xff]
        %v1462 = vld [vmem:[%s653 + $0x8] sm:$0xff]
        %v1463 = vld [vmem:[%s653 + $0x10] sm:$0xff]
        %v1464 = vld [vmem:[%s653 + $0x18] sm:$0xff]
        %v1465 = vld [vmem:[%s653 + $0x20] sm:$0xff]
        %v1466 = vld [vmem:[%s653 + $0x28] sm:$0xff]
        %v1467 = vld [vmem:[%s653 + $0x30] sm:$0xff]
        %v1468 = vld [vmem:[%s653 + $0x38] sm:$0xff]
        %v1469 = vld [vmem:[%s653 + $0x40] sm:$0xff]
        %v1470 = vld [vmem:[%s653 + $0x48] sm:$0xff]
        %v1471 = vld [vmem:[%s653 + $0x50] sm:$0xff]
        %v1472 = vld [vmem:[%s653 + $0x58] sm:$0xff]
        %v1473 = vld [vmem:[%s653 + $0x60] sm:$0xff]
        %v1474 = vld [vmem:[%s653 + $0x68] sm:$0xff]
        %v1475 = vld [vmem:[%s653 + $0x70] sm:$0xff]
        %v1476 = vld [vmem:[%s653 + $0x78] sm:$0xff]
        %v1477 = vld [vmem:[%s653 + $0x80] sm:$0xff]
        %v1478 = vld [vmem:[%s653 + $0x88] sm:$0xff]
        %v1479 = vld [vmem:[%s653 + $0x90] sm:$0xff]
        %v1480 = vld [vmem:[%s653 + $0x98] sm:$0xff]
        %v1481 = vld [vmem:[%s653 + $0xa0] sm:$0xff]
        %v1482 = vld [vmem:[%s653 + $0xa8] sm:$0xff]
        %v1483 = vld [vmem:[%s653 + $0xb0] sm:$0xff]
        %v1484 = vld [vmem:[%s653 + $0xb8] sm:$0xff]
        %v1485 = vld [vmem:[%s653 + $0xc0] sm:$0xff]
        %v1486 = vld [vmem:[%s653 + $0xc8] sm:$0xff]
        %v1487 = vld [vmem:[%s653 + $0xd0] sm:$0xff]
        %v1488 = vld [vmem:[%s653 + $0xd8] sm:$0xff]
        %v1489 = vld [vmem:[%s653 + $0xe0] sm:$0xff]
        %v1490 = vld [vmem:[%s653 + $0xe8] sm:$0xff]
        %v1491 = vld [vmem:[%s653 + $0xf0] sm:$0xff]
        %v1492 = vld [vmem:[%s653 + $0xf8] sm:$0xff]
        %v1493 = vld [vmem:[%s805] sm:$0xf]
        %v1495 = vperm.slane %v1493, 0
        %v1496 = vperm.slane %v1493, 1
        %v1497 = vperm.slane %v1493, 2
        %v1498 = vperm.slane %v1493, 3
        %v1535 = vunpack.c.l.b16 %v1461
        %v1536 = vunpack.c.h.b16 %v1461
        %v1537 = vunpack.c.l.b16 %v1462
        %v1538 = vunpack.c.h.b16 %v1462
        %v1539 = vunpack.c.l.b16 %v1463
        %v1540 = vunpack.c.h.b16 %v1463
        %v1541 = vunpack.c.l.b16 %v1464
        %v1542 = vunpack.c.h.b16 %v1464
        %v1543 = vunpack.c.l.b16 %v1465
        %v1544 = vunpack.c.h.b16 %v1465
        %v1545 = vunpack.c.l.b16 %v1466
        %v1546 = vunpack.c.h.b16 %v1466
        %v1547 = vunpack.c.l.b16 %v1467
        %v1548 = vunpack.c.h.b16 %v1467
        %v1549 = vunpack.c.l.b16 %v1468
        %v1550 = vunpack.c.h.b16 %v1468
        %v1551 = vunpack.c.l.b16 %v1469
        %v1552 = vunpack.c.h.b16 %v1469
        %v1553 = vunpack.c.l.b16 %v1470
        %v1554 = vunpack.c.h.b16 %v1470
        %v1555 = vunpack.c.l.b16 %v1471
        %v1556 = vunpack.c.h.b16 %v1471
        %v1557 = vunpack.c.l.b16 %v1472
        %v1558 = vunpack.c.h.b16 %v1472
        %v1559 = vunpack.c.l.b16 %v1473
        %v1560 = vunpack.c.h.b16 %v1473
        %v1561 = vunpack.c.l.b16 %v1474
        %v1562 = vunpack.c.h.b16 %v1474
        %v1563 = vunpack.c.l.b16 %v1475
        %v1564 = vunpack.c.h.b16 %v1475
        %v1565 = vunpack.c.l.b16 %v1476
        %v1566 = vunpack.c.h.b16 %v1476
        %v1567 = vunpack.c.l.b16 %v1477
        %v1568 = vunpack.c.h.b16 %v1477
        %v1569 = vunpack.c.l.b16 %v1478
        %v1570 = vunpack.c.h.b16 %v1478
        %v1571 = vunpack.c.l.b16 %v1479
        %v1572 = vunpack.c.h.b16 %v1479
        %v1573 = vunpack.c.l.b16 %v1480
        %v1574 = vunpack.c.h.b16 %v1480
        %v1575 = vunpack.c.l.b16 %v1481
        %v1576 = vunpack.c.h.b16 %v1481
        %v1577 = vunpack.c.l.b16 %v1482
        %v1578 = vunpack.c.h.b16 %v1482
        %v1579 = vunpack.c.l.b16 %v1483
        %v1580 = vunpack.c.h.b16 %v1483
        %v1581 = vunpack.c.l.b16 %v1484
        %v1582 = vunpack.c.h.b16 %v1484
        %v1583 = vunpack.c.l.b16 %v1485
        %v1584 = vunpack.c.h.b16 %v1485
        %v1585 = vunpack.c.l.b16 %v1486
        %v1586 = vunpack.c.h.b16 %v1486
        %v1587 = vunpack.c.l.b16 %v1487
        %v1588 = vunpack.c.h.b16 %v1487
        %v1589 = vunpack.c.l.b16 %v1488
        %v1590 = vunpack.c.h.b16 %v1488
        %v1591 = vunpack.c.l.b16 %v1489
        %v1592 = vunpack.c.h.b16 %v1489
        %v1593 = vunpack.c.l.b16 %v1490
        %v1594 = vunpack.c.h.b16 %v1490
        %v1595 = vunpack.c.l.b16 %v1491
        %v1596 = vunpack.c.h.b16 %v1491
        %v1597 = vunpack.c.l.b16 %v1492
        %v1598 = vunpack.c.h.b16 %v1492
        %v1599 = vpack.c.b16 %v1539, %v1535
        %v1600 = vpack.c.b16 %v1540, %v1536
        %v1601 = vpack.c.b16 %v1541, %v1537
        %v1602 = vpack.c.b16 %v1542, %v1538
        %v1603 = vpack.c.b16 %v1547, %v1543
        %v1604 = vpack.c.b16 %v1548, %v1544
        %v1605 = vpack.c.b16 %v1549, %v1545
        %v1606 = vpack.c.b16 %v1550, %v1546
        %v1607 = vpack.c.b16 %v1555, %v1551
        %v1608 = vpack.c.b16 %v1556, %v1552
        %v1609 = vpack.c.b16 %v1557, %v1553
        %v1610 = vpack.c.b16 %v1558, %v1554
        %v1611 = vpack.c.b16 %v1563, %v1559
        %v1612 = vpack.c.b16 %v1564, %v1560
        %v1613 = vpack.c.b16 %v1565, %v1561
        %v1614 = vpack.c.b16 %v1566, %v1562
        %v1615 = vpack.c.b16 %v1571, %v1567
        %v1616 = vpack.c.b16 %v1572, %v1568
        %v1617 = vpack.c.b16 %v1573, %v1569
        %v1618 = vpack.c.b16 %v1574, %v1570
        %v1619 = vpack.c.b16 %v1579, %v1575
        %v1620 = vpack.c.b16 %v1580, %v1576
        %v1621 = vpack.c.b16 %v1581, %v1577
        %v1622 = vpack.c.b16 %v1582, %v1578
        %v1623 = vpack.c.b16 %v1587, %v1583
        %v1624 = vpack.c.b16 %v1588, %v1584
        %v1625 = vpack.c.b16 %v1589, %v1585
        %v1626 = vpack.c.b16 %v1590, %v1586
        %v1627 = vpack.c.b16 %v1595, %v1591
        %v1628 = vpack.c.b16 %v1596, %v1592
        %v1629 = vpack.c.b16 %v1597, %v1593
        %v1630 = vpack.c.b16 %v1598, %v1594
        %1663 = vmatpush.bf16.msra.mxu0 %v1627
        %1664 = vmatpush.bf16.msra.mxu0 %v1623
        %1665 = vmatpush.bf16.msra.mxu0 %v1619
        %1666 = vmatpush.bf16.msra.mxu0 %v1615
        %1667 = vmatpush.bf16.msra.mxu0 %v1611
        %1668 = vmatpush.bf16.msra.mxu0 %v1607
        %1669 = vmatpush.bf16.msra.mxu0 %v1603
        %1670 = vmatpush.bf16.msra.mxu0 %v1599
        %1671 = vmatmul.bf16.gmra.mxu0 %v1459
        %v1672 = vpop.f32.mrf.mxu0
        %v1673 = vadd.f32 %v1495, %v1672
        %v1674 = vpop.f32.mrf.mxu0
        %v1675 = vadd.f32 %v1495, %v1674
        %1676 = vmatmul.bf16.gmra.mxu0 %v1460
        %v1677 = vpop.f32.mrf.mxu0
        %v1678 = vadd.f32 %v1495, %v1677
        %v1679 = vpop.f32.mrf.mxu0
        %v1680 = vadd.f32 %v1495, %v1679
        %1681 = vdwg.mxu0
        %1682 = vmatpush.bf16.msra.mxu0 %v1628
        %1683 = vmatpush.bf16.msra.mxu0 %v1624
        %1684 = vmatpush.bf16.msra.mxu0 %v1620
        %1685 = vmatpush.bf16.msra.mxu0 %v1616
        %1686 = vmatpush.bf16.msra.mxu0 %v1612
        %1687 = vmatpush.bf16.msra.mxu0 %v1608
        %1688 = vmatpush.bf16.msra.mxu0 %v1604
        %1689 = vmatpush.bf16.msra.mxu0 %v1600
        %1690 = vmatmul.bf16.gmra.mxu0 %v1459
        %v1691 = vpop.f32.mrf.mxu0
        %v1692 = vadd.f32 %v1496, %v1691
        %v1693 = vpop.f32.mrf.mxu0
        %v1694 = vadd.f32 %v1496, %v1693
        %1695 = vmatmul.bf16.gmra.mxu0 %v1460
        %v1696 = vpop.f32.mrf.mxu0
        %v1697 = vadd.f32 %v1496, %v1696
        %v1698 = vpop.f32.mrf.mxu0
        %v1699 = vadd.f32 %v1496, %v1698
        %1700 = vdwg.mxu0
        %1701 = vmatpush.bf16.msra.mxu0 %v1629
        %1702 = vmatpush.bf16.msra.mxu0 %v1625
        %1703 = vmatpush.bf16.msra.mxu0 %v1621
        %1704 = vmatpush.bf16.msra.mxu0 %v1617
        %1705 = vmatpush.bf16.msra.mxu0 %v1613
        %1706 = vmatpush.bf16.msra.mxu0 %v1609
        %1707 = vmatpush.bf16.msra.mxu0 %v1605
        %1708 = vmatpush.bf16.msra.mxu0 %v1601
        %1709 = vmatmul.bf16.gmra.mxu0 %v1459
        %v1710 = vpop.f32.mrf.mxu0
        %v1711 = vadd.f32 %v1497, %v1710
        %v1712 = vpop.f32.mrf.mxu0
        %v1713 = vadd.f32 %v1497, %v1712
        %1714 = vmatmul.bf16.gmra.mxu0 %v1460
        %v1715 = vpop.f32.mrf.mxu0
        %v1716 = vadd.f32 %v1497, %v1715
        %v1717 = vpop.f32.mrf.mxu0
        %v1718 = vadd.f32 %v1497, %v1717
        %1719 = vdwg.mxu0
        %1720 = vmatpush.bf16.msra.mxu0 %v1630
        %1721 = vmatpush.bf16.msra.mxu0 %v1626
        %1722 = vmatpush.bf16.msra.mxu0 %v1622
        %1723 = vmatpush.bf16.msra.mxu0 %v1618
        %1724 = vmatpush.bf16.msra.mxu0 %v1614
        %1725 = vmatpush.bf16.msra.mxu0 %v1610
        %1726 = vmatpush.bf16.msra.mxu0 %v1606
        %1727 = vmatpush.bf16.msra.mxu0 %v1602
        %1728 = vmatmul.bf16.gmra.mxu0 %v1459
        %v1729 = vpop.f32.mrf.mxu0
        %v1730 = vadd.f32 %v1498, %v1729
        %v1731 = vpop.f32.mrf.mxu0
        %v1732 = vadd.f32 %v1498, %v1731
        %1733 = vmatmul.bf16.gmra.mxu0 %v1460
        %v1734 = vpop.f32.mrf.mxu0
        %v1735 = vadd.f32 %v1498, %v1734
        %v1736 = vpop.f32.mrf.mxu0
        %v1737 = vadd.f32 %v1498, %v1736
        %1738 = vdwg.mxu0
        %v1739 = vmax.f32 %v1673, 0.0
        %v1740 = vmax.f32 %v1692, 0.0
        %v1741 = vmax.f32 %v1711, 0.0
        %v1742 = vmax.f32 %v1730, 0.0
        %v1743 = vmax.f32 %v1675, 0.0
        %v1744 = vmax.f32 %v1694, 0.0
        %v1745 = vmax.f32 %v1713, 0.0
        %v1746 = vmax.f32 %v1732, 0.0
        %v1747 = vmax.f32 %v1678, 0.0
        %v1748 = vmax.f32 %v1697, 0.0
        %v1749 = vmax.f32 %v1716, 0.0
        %v1750 = vmax.f32 %v1735, 0.0
        %v1751 = vmax.f32 %v1680, 0.0
        %v1752 = vmax.f32 %v1699, 0.0
        %v1753 = vmax.f32 %v1718, 0.0
        %v1754 = vmax.f32 %v1737, 0.0
        %v1755 = vpack.c.bf16 %v1743, %v1739
        %v1756 = vpack.c.bf16 %v1744, %v1740
        %v1757 = vpack.c.bf16 %v1745, %v1741
        %v1758 = vpack.c.bf16 %v1746, %v1742
        %v1759 = vpack.c.bf16 %v1751, %v1747
        %v1760 = vpack.c.bf16 %v1752, %v1748
        %v1761 = vpack.c.bf16 %v1753, %v1749
        %v1762 = vpack.c.bf16 %v1754, %v1750
        %v1763 = vld [vmem:[%s663] sm:$0xf]
        %v1764 = vld [vmem:[%s663 + $0x4] sm:$0xf]
        %v1765 = vld [vmem:[%s663 + $0x8] sm:$0xf]
        %v1766 = vld [vmem:[%s663 + $0xc] sm:$0xf]
        %v1767 = vld [vmem:[%s663 + $0x10] sm:$0xf]
        %v1768 = vld [vmem:[%s663 + $0x14] sm:$0xf]
        %v1769 = vld [vmem:[%s663 + $0x18] sm:$0xf]
        %v1770 = vld [vmem:[%s663 + $0x1c] sm:$0xf]
        %v1771 = vld [vmem:[%s663 + $0x20] sm:$0xf]
        %v1772 = vld [vmem:[%s663 + $0x24] sm:$0xf]
        %v1773 = vld [vmem:[%s663 + $0x28] sm:$0xf]
        %v1774 = vld [vmem:[%s663 + $0x2c] sm:$0xf]
        %v1775 = vld [vmem:[%s663 + $0x30] sm:$0xf]
        %v1776 = vld [vmem:[%s663 + $0x34] sm:$0xf]
        %v1777 = vld [vmem:[%s663 + $0x38] sm:$0xf]
        %v1778 = vld [vmem:[%s663 + $0x3c] sm:$0xf]
        %v1779 = vld [vmem:[%s663 + $0x40] sm:$0xf]
        %v1780 = vld [vmem:[%s663 + $0x44] sm:$0xf]
        %v1781 = vld [vmem:[%s663 + $0x48] sm:$0xf]
        %v1782 = vld [vmem:[%s663 + $0x4c] sm:$0xf]
        %v1783 = vld [vmem:[%s663 + $0x50] sm:$0xf]
        %v1784 = vld [vmem:[%s663 + $0x54] sm:$0xf]
        %v1785 = vld [vmem:[%s663 + $0x58] sm:$0xf]
        %v1786 = vld [vmem:[%s663 + $0x5c] sm:$0xf]
        %v1787 = vld [vmem:[%s663 + $0x60] sm:$0xf]
        %v1788 = vld [vmem:[%s663 + $0x64] sm:$0xf]
        %v1789 = vld [vmem:[%s663 + $0x68] sm:$0xf]
        %v1790 = vld [vmem:[%s663 + $0x6c] sm:$0xf]
        %v1791 = vld [vmem:[%s663 + $0x70] sm:$0xf]
        %v1792 = vld [vmem:[%s663 + $0x74] sm:$0xf]
        %v1793 = vld [vmem:[%s663 + $0x78] sm:$0xf]
        %v1794 = vld [vmem:[%s663 + $0x7c] sm:$0xf]
        %v1795 = vld [vmem:[%s663 + $0x80] sm:$0xf]
        %v1796 = vld [vmem:[%s663 + $0x84] sm:$0xf]
        %v1797 = vld [vmem:[%s663 + $0x88] sm:$0xf]
        %v1798 = vld [vmem:[%s663 + $0x8c] sm:$0xf]
        %v1799 = vld [vmem:[%s663 + $0x90] sm:$0xf]
        %v1800 = vld [vmem:[%s663 + $0x94] sm:$0xf]
        %v1801 = vld [vmem:[%s663 + $0x98] sm:$0xf]
        %v1802 = vld [vmem:[%s663 + $0x9c] sm:$0xf]
        %v1803 = vld [vmem:[%s663 + $0xa0] sm:$0xf]
        %v1804 = vld [vmem:[%s663 + $0xa4] sm:$0xf]
        %v1805 = vld [vmem:[%s663 + $0xa8] sm:$0xf]
        %v1806 = vld [vmem:[%s663 + $0xac] sm:$0xf]
        %v1807 = vld [vmem:[%s663 + $0xb0] sm:$0xf]
        %v1808 = vld [vmem:[%s663 + $0xb4] sm:$0xf]
        %v1809 = vld [vmem:[%s663 + $0xb8] sm:$0xf]
        %v1810 = vld [vmem:[%s663 + $0xbc] sm:$0xf]
        %v1811 = vld [vmem:[%s663 + $0xc0] sm:$0xf]
        %v1812 = vld [vmem:[%s663 + $0xc4] sm:$0xf]
        %v1813 = vld [vmem:[%s663 + $0xc8] sm:$0xf]
        %v1814 = vld [vmem:[%s663 + $0xcc] sm:$0xf]
        %v1815 = vld [vmem:[%s663 + $0xd0] sm:$0xf]
        %v1816 = vld [vmem:[%s663 + $0xd4] sm:$0xf]
        %v1817 = vld [vmem:[%s663 + $0xd8] sm:$0xf]
        %v1818 = vld [vmem:[%s663 + $0xdc] sm:$0xf]
        %v1819 = vld [vmem:[%s663 + $0xe0] sm:$0xf]
        %v1820 = vld [vmem:[%s663 + $0xe4] sm:$0xf]
        %v1821 = vld [vmem:[%s663 + $0xe8] sm:$0xf]
        %v1822 = vld [vmem:[%s663 + $0xec] sm:$0xf]
        %v1823 = vld [vmem:[%s663 + $0xf0] sm:$0xf]
        %v1824 = vld [vmem:[%s663 + $0xf4] sm:$0xf]
        %v1825 = vld [vmem:[%s663 + $0xf8] sm:$0xf]
        %v1826 = vld [vmem:[%s663 + $0xfc] sm:$0xf]
        %v1827 = vld [vmem:[%s808] sm:$0x1]
        %v1829 = vperm.slane %v1827, 0
        %v1895 = vunpack.c.l.b16 %v1763
        %v1896 = vunpack.c.l.b16 %v1764
        %v1897 = vunpack.c.l.b16 %v1765
        %v1898 = vunpack.c.l.b16 %v1766
        %v1899 = vunpack.c.l.b16 %v1767
        %v1900 = vunpack.c.l.b16 %v1768
        %v1901 = vunpack.c.l.b16 %v1769
        %v1902 = vunpack.c.l.b16 %v1770
        %v1903 = vunpack.c.l.b16 %v1771
        %v1904 = vunpack.c.l.b16 %v1772
        %v1905 = vunpack.c.l.b16 %v1773
        %v1906 = vunpack.c.l.b16 %v1774
        %v1907 = vunpack.c.l.b16 %v1775
        %v1908 = vunpack.c.l.b16 %v1776
        %v1909 = vunpack.c.l.b16 %v1777
        %v1910 = vunpack.c.l.b16 %v1778
        %v1911 = vunpack.c.l.b16 %v1779
        %v1912 = vunpack.c.l.b16 %v1780
        %v1913 = vunpack.c.l.b16 %v1781
        %v1914 = vunpack.c.l.b16 %v1782
        %v1915 = vunpack.c.l.b16 %v1783
        %v1916 = vunpack.c.l.b16 %v1784
        %v1917 = vunpack.c.l.b16 %v1785
        %v1918 = vunpack.c.l.b16 %v1786
        %v1919 = vunpack.c.l.b16 %v1787
        %v1920 = vunpack.c.l.b16 %v1788
        %v1921 = vunpack.c.l.b16 %v1789
        %v1922 = vunpack.c.l.b16 %v1790
        %v1923 = vunpack.c.l.b16 %v1791
        %v1924 = vunpack.c.l.b16 %v1792
        %v1925 = vunpack.c.l.b16 %v1793
        %v1926 = vunpack.c.l.b16 %v1794
        %v1927 = vunpack.c.l.b16 %v1795
        %v1928 = vunpack.c.l.b16 %v1796
        %v1929 = vunpack.c.l.b16 %v1797
        %v1930 = vunpack.c.l.b16 %v1798
        %v1931 = vunpack.c.l.b16 %v1799
        %v1932 = vunpack.c.l.b16 %v1800
        %v1933 = vunpack.c.l.b16 %v1801
        %v1934 = vunpack.c.l.b16 %v1802
        %v1935 = vunpack.c.l.b16 %v1803
        %v1936 = vunpack.c.l.b16 %v1804
        %v1937 = vunpack.c.l.b16 %v1805
        %v1938 = vunpack.c.l.b16 %v1806
        %v1939 = vunpack.c.l.b16 %v1807
        %v1940 = vunpack.c.l.b16 %v1808
        %v1941 = vunpack.c.l.b16 %v1809
        %v1942 = vunpack.c.l.b16 %v1810
        %v1943 = vunpack.c.l.b16 %v1811
        %v1944 = vunpack.c.l.b16 %v1812
        %v1945 = vunpack.c.l.b16 %v1813
        %v1946 = vunpack.c.l.b16 %v1814
        %v1947 = vunpack.c.l.b16 %v1815
        %v1948 = vunpack.c.l.b16 %v1816
        %v1949 = vunpack.c.l.b16 %v1817
        %v1950 = vunpack.c.l.b16 %v1818
        %v1951 = vunpack.c.l.b16 %v1819
        %v1952 = vunpack.c.l.b16 %v1820
        %v1953 = vunpack.c.l.b16 %v1821
        %v1954 = vunpack.c.l.b16 %v1822
        %v1955 = vunpack.c.l.b16 %v1823
        %v1956 = vunpack.c.l.b16 %v1824
        %v1957 = vunpack.c.l.b16 %v1825
        %v1958 = vunpack.c.l.b16 %v1826
        %v1959 = vpack.c.b16 %v1896, %v1895
        %v1960 = vpack.c.b16 %v1898, %v1897
        %v1961 = vpack.c.b16 %v1900, %v1899
        %v1962 = vpack.c.b16 %v1902, %v1901
        %v1963 = vpack.c.b16 %v1904, %v1903
        %v1964 = vpack.c.b16 %v1906, %v1905
        %v1965 = vpack.c.b16 %v1908, %v1907
        %v1966 = vpack.c.b16 %v1910, %v1909
        %v1967 = vpack.c.b16 %v1912, %v1911
        %v1968 = vpack.c.b16 %v1914, %v1913
        %v1969 = vpack.c.b16 %v1916, %v1915
        %v1970 = vpack.c.b16 %v1918, %v1917
        %v1971 = vpack.c.b16 %v1920, %v1919
        %v1972 = vpack.c.b16 %v1922, %v1921
        %v1973 = vpack.c.b16 %v1924, %v1923
        %v1974 = vpack.c.b16 %v1926, %v1925
        %v1975 = vpack.c.b16 %v1928, %v1927
        %v1976 = vpack.c.b16 %v1930, %v1929
        %v1977 = vpack.c.b16 %v1932, %v1931
        %v1978 = vpack.c.b16 %v1934, %v1933
        %v1979 = vpack.c.b16 %v1936, %v1935
        %v1980 = vpack.c.b16 %v1938, %v1937
        %v1981 = vpack.c.b16 %v1940, %v1939
        %v1982 = vpack.c.b16 %v1942, %v1941
        %v1983 = vpack.c.b16 %v1944, %v1943
        %v1984 = vpack.c.b16 %v1946, %v1945
        %v1985 = vpack.c.b16 %v1948, %v1947
        %v1986 = vpack.c.b16 %v1950, %v1949
        %v1987 = vpack.c.b16 %v1952, %v1951
        %v1988 = vpack.c.b16 %v1954, %v1953
        %v1989 = vpack.c.b16 %v1956, %v1955
        %v1990 = vpack.c.b16 %v1958, %v1957
        %2023 = vmatpush.bf16.msra.mxu0 %v1966
        %2024 = vmatpush.bf16.msra.mxu0 %v1965
        %2025 = vmatpush.bf16.msra.mxu0 %v1964
        %2026 = vmatpush.bf16.msra.mxu0 %v1963
        %2027 = vmatpush.bf16.msra.mxu0 %v1962
        %2028 = vmatpush.bf16.msra.mxu0 %v1961
        %2029 = vmatpush.bf16.msra.mxu0 %v1960
        %2030 = vmatpush.bf16.msra.mxu0 %v1959
        %2031 = vmatmul.bf16.gmra.mxu0 %v1755
        %v2032 = vpop.f32.mrf.mxu0
        %v2033 = vadd.f32 %v1829, %v2032
        %v2034 = vpop.f32.mrf.mxu0
        %v2035 = vadd.f32 %v1829, %v2034
        %2036 = vmatmul.bf16.gmra.mxu0 %v1759
        %v2037 = vpop.f32.mrf.mxu0
        %v2038 = vadd.f32 %v1829, %v2037
        %v2039 = vpop.f32.mrf.mxu0
        %v2040 = vadd.f32 %v1829, %v2039
        %2041 = vdwg.mxu0
        %2042 = vmatpush.bf16.msra.mxu0 %v1974
        %2043 = vmatpush.bf16.msra.mxu0 %v1973
        %2044 = vmatpush.bf16.msra.mxu0 %v1972
        %2045 = vmatpush.bf16.msra.mxu0 %v1971
        %2046 = vmatpush.bf16.msra.mxu0 %v1970
        %2047 = vmatpush.bf16.msra.mxu0 %v1969
        %2048 = vmatpush.bf16.msra.mxu0 %v1968
        %2049 = vmatpush.bf16.msra.mxu0 %v1967
        %2050 = vmatmul.bf16.gmra.mxu0 %v1756
        %v2051 = vpop.f32.mrf.mxu0
        %v2052 = vadd.f32 %v2033, %v2051
        %v2053 = vpop.f32.mrf.mxu0
        %v2054 = vadd.f32 %v2035, %v2053
        %2055 = vmatmul.bf16.gmra.mxu0 %v1760
        %v2056 = vpop.f32.mrf.mxu0
        %v2057 = vadd.f32 %v2038, %v2056
        %v2058 = vpop.f32.mrf.mxu0
        %v2059 = vadd.f32 %v2040, %v2058
        %2060 = vdwg.mxu0
        %2061 = vmatpush.bf16.msra.mxu0 %v1982
        %2062 = vmatpush.bf16.msra.mxu0 %v1981
        %2063 = vmatpush.bf16.msra.mxu0 %v1980
        %2064 = vmatpush.bf16.msra.mxu0 %v1979
        %2065 = vmatpush.bf16.msra.mxu0 %v1978
        %2066 = vmatpush.bf16.msra.mxu0 %v1977
        %2067 = vmatpush.bf16.msra.mxu0 %v1976
        %2068 = vmatpush.bf16.msra.mxu0 %v1975
        %2069 = vmatmul.bf16.gmra.mxu0 %v1757
        %v2070 = vpop.f32.mrf.mxu0
        %v2071 = vadd.f32 %v2052, %v2070
        %v2072 = vpop.f32.mrf.mxu0
        %v2073 = vadd.f32 %v2054, %v2072
        %2074 = vmatmul.bf16.gmra.mxu0 %v1761
        %v2075 = vpop.f32.mrf.mxu0
        %v2076 = vadd.f32 %v2057, %v2075
        %v2077 = vpop.f32.mrf.mxu0
        %v2078 = vadd.f32 %v2059, %v2077
        %2079 = vdwg.mxu0
        %2080 = vmatpush.bf16.msra.mxu0 %v1990
        %2081 = vmatpush.bf16.msra.mxu0 %v1989
        %2082 = vmatpush.bf16.msra.mxu0 %v1988
        %2083 = vmatpush.bf16.msra.mxu0 %v1987
        %2084 = vmatpush.bf16.msra.mxu0 %v1986
        %2085 = vmatpush.bf16.msra.mxu0 %v1985
        %2086 = vmatpush.bf16.msra.mxu0 %v1984
        %2087 = vmatpush.bf16.msra.mxu0 %v1983
        %2088 = vmatmul.bf16.gmra.mxu0 %v1758
        %v2089 = vpop.f32.mrf.mxu0
        %v2090 = vadd.f32 %v2071, %v2089
        %v2091 = vpop.f32.mrf.mxu0
        %v2092 = vadd.f32 %v2073, %v2091
        %2093 = vmatmul.bf16.gmra.mxu0 %v1762
        %v2094 = vpop.f32.mrf.mxu0
        %v2095 = vadd.f32 %v2076, %v2094
        %v2096 = vpop.f32.mrf.mxu0
        %v2097 = vadd.f32 %v2078, %v2096
        %2098 = vdwg.mxu0
        %v2099 = vadd.f32 %v1455, %v2090
        %v2100 = vadd.f32 %v1456, %v2092
        %v2101 = vadd.f32 %v1457, %v2095
        %v2102 = vadd.f32 %v1458, %v2097
        %v2103 = vld [vmem:[%s811] sm:$0x1]
        %v2104 = vld [vmem:[%s814] sm:$0x1]
        %2105 = vadd.xlane.f32.xlu0 %v2099
        %v2106 = vpop.xlane.xlu0 %2105
        %2107 = vadd.xlane.f32.xlu0 %v2100
        %v2108 = vpop.xlane.xlu0 %2107
        %2109 = vadd.xlane.f32.xlu0 %v2101
        %v2110 = vpop.xlane.xlu0 %2109
        %2111 = vadd.xlane.f32.xlu0 %v2102
        %v2112 = vpop.xlane.xlu0 %2111
        %v2113 = vmul.f32 %v2106, %v1364
        %v2114 = vmul.f32 %v2108, %v1364
        %v2115 = vmul.f32 %v2110, %v1364
        %v2116 = vmul.f32 %v2112, %v1364
        %v2117 = vmul.f32 %v2099, %v2099
        %v2118 = vmul.f32 %v2100, %v2100
        %v2119 = vmul.f32 %v2101, %v2101
        %v2120 = vmul.f32 %v2102, %v2102
        %2121 = vadd.xlane.f32.xlu0 %v2117
        %v2122 = vpop.xlane.xlu0 %2121
        %2123 = vadd.xlane.f32.xlu0 %v2118
        %v2124 = vpop.xlane.xlu0 %2123
        %2125 = vadd.xlane.f32.xlu0 %v2119
        %v2126 = vpop.xlane.xlu0 %2125
        %2127 = vadd.xlane.f32.xlu0 %v2120
        %v2128 = vpop.xlane.xlu0 %2127
        %v2129 = vmul.f32 %v2122, %v1364
        %v2130 = vmul.f32 %v2124, %v1364
        %v2131 = vmul.f32 %v2126, %v1364
        %v2132 = vmul.f32 %v2128, %v1364
        %v2133 = vmul.f32 %v2113, %v2113
        %v2134 = vmul.f32 %v2114, %v2114
        %v2135 = vmul.f32 %v2115, %v2115
        %v2136 = vmul.f32 %v2116, %v2116
        %v2137 = vsub.f32 %v2129, %v2133
        %v2138 = vsub.f32 %v2130, %v2134
        %v2139 = vsub.f32 %v2131, %v2135
        %v2140 = vsub.f32 %v2132, %v2136
        %v2141 = vsub.f32 %v2099, %v2113
        %v2142 = vsub.f32 %v2100, %v2114
        %v2143 = vsub.f32 %v2101, %v2115
        %v2144 = vsub.f32 %v2102, %v2116
        %v2145 = vadd.f32 %v2137, 1e-05
        %v2146 = vadd.f32 %v2138, 1e-05
        %v2147 = vadd.f32 %v2139, 1e-05
        %v2148 = vadd.f32 %v2140, 1e-05
        %v2149 = vrsqrt.pop %v2145
        %v2150 = vmul.f32 %v2149, %v2145
        %v2151 = vmul.f32 %v2150, %v2149
        %v2152 = vmul.f32 0.5, %v2151
        %v2153 = vsub.f32 1.5, %v2152
        %v2154 = vmul.f32 %v2149, %v2153
        %vm2155 = vweird.f32 %v2145
        %vm2156 = vweird.f32 %v2149
        %vm2157 = vmor %vm2155, %vm2156
        %v2158 = vsel %vm2157, %v2149, %v2154
        %v2159 = vrsqrt.pop %v2146
        %v2160 = vmul.f32 %v2159, %v2146
        %v2161 = vmul.f32 %v2160, %v2159
        %v2162 = vmul.f32 0.5, %v2161
        %v2163 = vsub.f32 1.5, %v2162
        %v2164 = vmul.f32 %v2159, %v2163
        %vm2165 = vweird.f32 %v2146
        %vm2166 = vweird.f32 %v2159
        %vm2167 = vmor %vm2165, %vm2166
        %v2168 = vsel %vm2167, %v2159, %v2164
        %v2169 = vrsqrt.pop %v2147
        %v2170 = vmul.f32 %v2169, %v2147
        %v2171 = vmul.f32 %v2170, %v2169
        %v2172 = vmul.f32 0.5, %v2171
        %v2173 = vsub.f32 1.5, %v2172
        %v2174 = vmul.f32 %v2169, %v2173
        %vm2175 = vweird.f32 %v2147
        %vm2176 = vweird.f32 %v2169
        %vm2177 = vmor %vm2175, %vm2176
        %v2178 = vsel %vm2177, %v2169, %v2174
        %v2179 = vrsqrt.pop %v2148
        %v2180 = vmul.f32 %v2179, %v2148
        %v2181 = vmul.f32 %v2180, %v2179
        %v2182 = vmul.f32 0.5, %v2181
        %v2183 = vsub.f32 1.5, %v2182
        %v2184 = vmul.f32 %v2179, %v2183
        %vm2185 = vweird.f32 %v2148
        %vm2186 = vweird.f32 %v2179
        %vm2187 = vmor %vm2185, %vm2186
        %v2188 = vsel %vm2187, %v2179, %v2184
        %v2189 = vmul.f32 %v2141, %v2158
        %v2190 = vmul.f32 %v2142, %v2168
        %v2191 = vmul.f32 %v2143, %v2178
        %v2192 = vmul.f32 %v2144, %v2188
        %v2194 = vperm.slane %v2103, 0
        %v2196 = vmul.f32 %v2189, %v2194
        %v2197 = vmul.f32 %v2190, %v2194
        %v2198 = vmul.f32 %v2191, %v2194
        %v2199 = vmul.f32 %v2192, %v2194
        %v2201 = vperm.slane %v2104, 0
        %v2203 = vadd.f32 %v2196, %v2201
        %v2204 = vadd.f32 %v2197, %v2201
        %v2205 = vadd.f32 %v2198, %v2201
        %v2206 = vadd.f32 %v2199, %v2201
        %2207 = vst [vmem:[#allocation2] sm:$0xff] %v2203
        %2208 = vst [vmem:[#allocation2 + $0x8] sm:$0xff] %v2204
        %2209 = vst [vmem:[#allocation2 + $0x10] sm:$0xff] %v2205
        %2210 = vst [vmem:[#allocation2 + $0x18] sm:$0xff] %v2206
        %p2211 = scmp.eq.s32.totalorder %s42, 1
        // Predicated region
        $region116: #{tpu_custom_call.1} parent=83 // pred_check
          %p2212 = pneg %p2211
        $region117: #{tpu_custom_call.1} parent=83 // pred_check_branch
          %2214 = sbr.rel (%p2212) target = $region119
        $region118: #{tpu_custom_call.1} parent=83 // pred_region
          // Predicated region
          $region120: #{tpu_custom_call.1} parent=118 // pred_check
            _
          $region121: #{tpu_custom_call.1} parent=118 // pred_check_branch
            %2216 = sbr.rel (0) target = $region123
          $region122: #{tpu_custom_call.1} parent=118 // pred_region
            loop: start=0, step=1, limit=1
            $region124: #{tpu_custom_call.1} parent=122 // loop_pre_header
              _
            $region125: #{tpu_custom_call.1} parent=122 // loop_header
              %s2218 = sphi 0, %s2222
              %p2219 = scmp.ge.s32.totalorder %s2218, 1
              %s2223 = sphi %s17, %s17
              %s2224 = sphi [#allocation3], [#allocation3]
            $region126: #{tpu_custom_call.1} parent=122 // loop_header_branch
              %2221 = sbr.rel (%p2219) target = $region130
            $region127: #{tpu_custom_call.1} parent=122 // loop_body
              %v2225 = vld [vmem:[%s2223] sm:$0xff]
              %2226 = vst [vmem:[%s2224] sm:$0xff] %v2225
              %v2227 = vld [vmem:[%s2223 + $0x8] sm:$0xff]
              %2228 = vst [vmem:[%s2224 + $0x8] sm:$0xff] %v2227
              %v2229 = vld [vmem:[%s2223 + $0x10] sm:$0xff]
              %2230 = vst [vmem:[%s2224 + $0x10] sm:$0xff] %v2229
              %v2231 = vld [vmem:[%s2223 + $0x18] sm:$0xff]
              %2232 = vst [vmem:[%s2224 + $0x18] sm:$0xff] %v2231
              %v2233 = vld [vmem:[%s2223 + $0x20] sm:$0xff]
              %2234 = vst [vmem:[%s2224 + $0x20] sm:$0xff] %v2233
              %v2235 = vld [vmem:[%s2223 + $0x28] sm:$0xff]
              %2236 = vst [vmem:[%s2224 + $0x28] sm:$0xff] %v2235
              %v2237 = vld [vmem:[%s2223 + $0x30] sm:$0xff]
              %2238 = vst [vmem:[%s2224 + $0x30] sm:$0xff] %v2237
              %v2239 = vld [vmem:[%s2223 + $0x38] sm:$0xff]
              %2240 = vst [vmem:[%s2224 + $0x38] sm:$0xff] %v2239
              %v2241 = vld [vmem:[%s2223 + $0x40] sm:$0xff]
              %2242 = vst [vmem:[%s2224 + $0x40] sm:$0xff] %v2241
              %v2243 = vld [vmem:[%s2223 + $0x48] sm:$0xff]
              %2244 = vst [vmem:[%s2224 + $0x48] sm:$0xff] %v2243
              %v2245 = vld [vmem:[%s2223 + $0x50] sm:$0xff]
              %2246 = vst [vmem:[%s2224 + $0x50] sm:$0xff] %v2245
              %v2247 = vld [vmem:[%s2223 + $0x58] sm:$0xff]
              %2248 = vst [vmem:[%s2224 + $0x58] sm:$0xff] %v2247
              %v2249 = vld [vmem:[%s2223 + $0x60] sm:$0xff]
              %2250 = vst [vmem:[%s2224 + $0x60] sm:$0xff] %v2249
              %v2251 = vld [vmem:[%s2223 + $0x68] sm:$0xff]
              %2252 = vst [vmem:[%s2224 + $0x68] sm:$0xff] %v2251
              %v2253 = vld [vmem:[%s2223 + $0x70] sm:$0xff]
              %2254 = vst [vmem:[%s2224 + $0x70] sm:$0xff] %v2253
              %v2255 = vld [vmem:[%s2223 + $0x78] sm:$0xff]
              %2256 = vst [vmem:[%s2224 + $0x78] sm:$0xff] %v2255
            $region128: #{tpu_custom_call.1} parent=122 // loop_footer
              %s2222 = sadd.s32 1, %s2218
            $region129: #{tpu_custom_call.1} parent=122 // loop_footer_branch
              %2217 = sbr.rel target = $region125
            $region130: #{tpu_custom_call.1} parent=122 // loop_exit
              _
          $region123: #{tpu_custom_call.1} parent=118 // pred_fallthru
            _
          // Predicated region
          $region131: #{tpu_custom_call.1} parent=118 // pred_check
            _
          $region132: #{tpu_custom_call.1} parent=118 // pred_check_branch
            %2258 = sbr.rel target = $region134
          $region133: #{tpu_custom_call.1} parent=118 // pred_region
            _
          $region134: #{tpu_custom_call.1} parent=118 // pred_fallthru
            _
          // Predicated region
          $region135: #{tpu_custom_call.1} parent=118 // pred_check
            _
          $region136: #{tpu_custom_call.1} parent=118 // pred_check_branch
            %2261 = sbr.rel (0) target = $region138
          $region137: #{tpu_custom_call.1} parent=118 // pred_region
            %2262 = vsyncadd [#allocation5], 2048
          $region138: #{tpu_custom_call.1} parent=118 // pred_fallthru
            _
          %s2263 = scalar_lea.sflag [#allocation5], 1
          // Predicated region
          $region139: #{tpu_custom_call.1} parent=118 // pred_check
            _
          $region140: #{tpu_custom_call.1} parent=118 // pred_check_branch
            %2265 = sbr.rel target = $region142
          $region141: #{tpu_custom_call.1} parent=118 // pred_region
            // Predicated region
            $region154: #{tpu_custom_call.1} parent=141 // pred_check
              _
            $region155: #{tpu_custom_call.1} parent=141 // pred_check_branch
              %2281 = sbr.rel (0) target = $region157
            $region156: #{tpu_custom_call.1} parent=141 // pred_region
              %s2283 = ssub.s32 2, 1
              loop: start=0, step=1, limit=1
              $region158: #{tpu_custom_call.1} parent=156 // loop_pre_header
                _
              $region159: #{tpu_custom_call.1} parent=156 // loop_header
                %s2285 = sphi 0, %s2289
                %p2286 = scmp.ge.s32.totalorder %s2285, 1
                %s2290 = sphi %s18, %s18
                %s2291 = sphi [#allocation4], [#allocation4]
              $region160: #{tpu_custom_call.1} parent=156 // loop_header_branch
                %2288 = sbr.rel (%p2286) target = $region164
              $region161: #{tpu_custom_call.1} parent=156 // loop_body
                %v2292 = vld [vmem:[%s2290] sm:%s2283]
                %2293 = vst [vmem:[%s2291] sm:%s2283] %v2292
              $region162: #{tpu_custom_call.1} parent=156 // loop_footer
                %s2289 = sadd.s32 1, %s2285
              $region163: #{tpu_custom_call.1} parent=156 // loop_footer_branch
                %2284 = sbr.rel target = $region159
              $region164: #{tpu_custom_call.1} parent=156 // loop_exit
                _
            $region157: #{tpu_custom_call.1} parent=141 // pred_fallthru
              _
          $region142: #{tpu_custom_call.1} parent=118 // pred_fallthru
            _
          // Predicated region
          $region143: #{tpu_custom_call.1} parent=118 // pred_check
            _
          $region144: #{tpu_custom_call.1} parent=118 // pred_check_branch
            %2267 = sbr.rel (0) target = $region146
          $region145: #{tpu_custom_call.1} parent=118 // pred_region
            %s2269 = ssub.s32 2, 1
            loop: start=0, step=1, limit=1
            $region147: #{tpu_custom_call.1} parent=145 // loop_pre_header
              _
            $region148: #{tpu_custom_call.1} parent=145 // loop_header
              %s2271 = sphi 0, %s2275
              %p2272 = scmp.ge.s32.totalorder %s2271, 1
              %s2276 = sphi %s18, %s18
              %s2277 = sphi [#allocation4], [#allocation4]
            $region149: #{tpu_custom_call.1} parent=145 // loop_header_branch
              %2274 = sbr.rel (%p2272) target = $region153
            $region150: #{tpu_custom_call.1} parent=145 // loop_body
              %v2278 = vld [vmem:[%s2276] sm:%s2269]
              %2279 = vst [vmem:[%s2277] sm:%s2269] %v2278
            $region151: #{tpu_custom_call.1} parent=145 // loop_footer
              %s2275 = sadd.s32 1, %s2271
            $region152: #{tpu_custom_call.1} parent=145 // loop_footer_branch
              %2270 = sbr.rel target = $region148
            $region153: #{tpu_custom_call.1} parent=145 // loop_exit
              _
          $region146: #{tpu_custom_call.1} parent=118 // pred_fallthru
            _
          // Predicated region
          $region165: #{tpu_custom_call.1} parent=118 // pred_check
            _
          $region166: #{tpu_custom_call.1} parent=118 // pred_check_branch
            %2296 = sbr.rel (0) target = $region168
          $region167: #{tpu_custom_call.1} parent=118 // pred_region
            %2297 = vsyncadd %s2263, 16
          $region168: #{tpu_custom_call.1} parent=118 // pred_fallthru
            _
          %s2298 = smul.u32 128, 1
          %s2299 = sshll.u32 %s2298, 4
          %2300 = dma.done [#allocation5], %s2299
          %s2301 = smul.u32 1, 1
          %s2302 = sshll.u32 %s2301, 4
          %2303 = dma.done %s2263, %s2302
          %v2304 = vld [vmem:[#allocation2] sm:$0xff]
          %v2305 = vld [vmem:[#allocation2 + $0x8] sm:$0xff]
          %v2306 = vld [vmem:[#allocation2 + $0x10] sm:$0xff]
          %v2307 = vld [vmem:[#allocation2 + $0x18] sm:$0xff]
          %v2308 = vadd.f32 %v2304, %v2305
          %v2309 = vrot.slane %v2308, 4
          %v2310 = vadd.f32 %v2308, %v2309
          %v2311 = vrot.slane %v2310, 2
          %v2312 = vadd.f32 %v2310, %v2311
          %v2313 = vrot.slane %v2312, 1
          %v2314 = vadd.f32 %v2312, %v2313
          %v2315 = vadd.f32 %v2306, %v2307
          %v2316 = vrot.slane %v2315, 4
          %v2317 = vadd.f32 %v2315, %v2316
          %v2318 = vrot.slane %v2317, 2
          %v2319 = vadd.f32 %v2317, %v2318
          %v2320 = vrot.slane %v2319, 1
          %v2321 = vadd.f32 %v2319, %v2320
          %v2322 = vrcp.pop 16.0
          %v2323 = vmul.f32 16.0, %v2322
          %v2324 = vsub.f32 1.0, %v2323
          %v2325 = vmul.f32 %v2322, %v2324
          %v2326 = vadd.f32 %v2322, %v2325
          %vm2327 = vweird.f32 %v2322
          %v2328 = vsel %vm2327, %v2322, %v2326
          %v2329 = vmul.f32 %v2314, %v2328
          %v2330 = vmul.f32 %v2321, %v2328
          %v2331 = vld [vmem:[#allocation3] sm:$0xff]
          %v2332 = vld [vmem:[#allocation3 + $0x8] sm:$0xff]
          %v2333 = vld [vmem:[#allocation3 + $0x10] sm:$0xff]
          %v2334 = vld [vmem:[#allocation3 + $0x18] sm:$0xff]
          %v2335 = vld [vmem:[#allocation3 + $0x20] sm:$0xff]
          %v2336 = vld [vmem:[#allocation3 + $0x28] sm:$0xff]
          %v2337 = vld [vmem:[#allocation3 + $0x30] sm:$0xff]
          %v2338 = vld [vmem:[#allocation3 + $0x38] sm:$0xff]
          %v2339 = vld [vmem:[#allocation3 + $0x40] sm:$0xff]
          %v2340 = vld [vmem:[#allocation3 + $0x48] sm:$0xff]
          %v2341 = vld [vmem:[#allocation3 + $0x50] sm:$0xff]
          %v2342 = vld [vmem:[#allocation3 + $0x58] sm:$0xff]
          %v2343 = vld [vmem:[#allocation3 + $0x60] sm:$0xff]
          %v2344 = vld [vmem:[#allocation3 + $0x68] sm:$0xff]
          %v2345 = vld [vmem:[#allocation3 + $0x70] sm:$0xff]
          %v2346 = vld [vmem:[#allocation3 + $0x78] sm:$0xff]
          %v2347 = vld [vmem:[#allocation4] sm:$0x1]
          %v2349 = vperm.slane %v2347, 0
          %vm2353 = vcmask 1041409
          %v2354 = vsel %vm2353, %v2330, %v2329
          %2356 = vmatpush.msra.mxu0 %v2346
          %2357 = vmatpush.msra.mxu0 %v2345
          %2358 = vmatpush.msra.mxu0 %v2344
          %2359 = vmatpush.msra.mxu0 %v2343
          %2360 = vmatpush.msra.mxu0 %v2342
          %2361 = vmatpush.msra.mxu0 %v2341
          %2362 = vmatpush.msra.mxu0 %v2340
          %2363 = vmatpush.msra.mxu0 %v2339
          %2364 = vmatpush.msra.mxu0 %v2338
          %2365 = vmatpush.msra.mxu0 %v2337
          %2366 = vmatpush.msra.mxu0 %v2336
          %2367 = vmatpush.msra.mxu0 %v2335
          %2368 = vmatpush.msra.mxu0 %v2334
          %2369 = vmatpush.msra.mxu0 %v2333
          %2370 = vmatpush.msra.mxu0 %v2332
          %2371 = vmatpush.msra.mxu0 %v2331
          %2372 = vmatmul.f32.gmra.mxu0 %v2354
          %v2373 = vpop.f32.mrf.mxu0
          %v2374 = vadd.f32 %v2349, %v2373
          %2375 = vdwg.mxu0
          %vm2376 = vcmask 9216
          %2377 = vst.msk [vmem:[#allocation11] sm:$0x3] %vm2376, %v2374
        $region119: #{tpu_custom_call.1} parent=83 // pred_fallthru
          _
        // Predicated region
        $region169: #{tpu_custom_call.1} parent=83 // pred_check
          %p2378 = pneg %p483
        $region170: #{tpu_custom_call.1} parent=83 // pred_check_branch
          %2380 = sbr.rel (%p2378) target = $region172
        $region171: #{tpu_custom_call.1} parent=83 // pred_region
          %2382 = vsyncadd [#allocation8], 0
          %s2383 = smul.addr %s41, 2
          %s2384 = scalar_lea.hbm %s19, %s2383
          %s2386 = sshll.u32 [#allocation11], 4
          %s2387 = int_to_ptr.vmem [resolvable:$true] %s2386
          %s2388 = sshll.u32 %s2384, 4
          %s2389 = int_to_ptr.hbm [resolvable:$true] %s2388
          %2391 = dma.vmem_to_hbm [thread:$0]  %s2387, 32, %s2389, [#allocation8]
        $region172: #{tpu_custom_call.1} parent=83 // pred_fallthru
          _
        // Predicated region
        $region173: #{tpu_custom_call.1} parent=83 // pred_check
          %p2392 = pneg %p483
        $region174: #{tpu_custom_call.1} parent=83 // pred_check_branch
          %2394 = sbr.rel (%p2392) target = $region176
        $region175: #{tpu_custom_call.1} parent=83 // pred_region
          %2396 = dma.done [#allocation8], 32
        $region176: #{tpu_custom_call.1} parent=83 // pred_fallthru
          _
      $region84: #{tpu_custom_call.1} parent=5 // pred_fallthru
        _
      %p2397 = scmp.le.s32.totalorder 2, %s32
      // Predicated region
      $region177: #{tpu_custom_call.1} parent=5 // pred_check
        %p2398 = pneg %p2397
      $region178: #{tpu_custom_call.1} parent=5 // pred_check_branch
        %2400 = sbr.rel (%p2398) target = $region180
      $region179: #{tpu_custom_call.1} parent=5 // pred_region
        %s2401 = ssub.s32 %s32, 2
      $region180: #{tpu_custom_call.1} parent=5 // pred_fallthru
        _
    $region6: #{tpu_custom_call.1} parent=1 // loop_footer
      %s36 = sadd.s32 1, %s32
    $region7: #{tpu_custom_call.1} parent=1 // loop_footer_branch
      %31 = sbr.rel target = $region3
    $region8: #{tpu_custom_call.1} parent=1 // loop_exit
      _
    %2402 = vsyncpa [#allocation7], 1
    %s2403 = scalar_lea.sflag [#allocation7], 1
    %2404 = vsyncpa %s2403, 1
    %2405 = vsyncpa [#allocation10], 1
    %s2406 = scalar_lea.sflag [#allocation10], 1
    %2407 = vsyncpa %s2406, 1
    %2408 = vsyncpa [#allocation8], 1
    %s2409 = scalar_lea.sflag [#allocation8], 1
    %2410 = vsyncpa %s2409, 1
  %2411 = vsyncmov [#allocation5]
  %s2412 = vpop.sfrf %2411
  %p2413 = scmp.eq.s32.totalorder %s2412, 0
  %p2414 = pneg %p2413
  %2416 = shalt.err (%p2414)
  %s2417 = scalar_lea.sflag [#allocation5], 1
  %2418 = vsyncmov %s2417
  %s2419 = vpop.sfrf %2418
  %p2420 = scmp.eq.s32.totalorder %s2419, 0
  %p2421 = pneg %p2420
  %2423 = shalt.err (%p2421)

</llo_original>
